<compile_context>
chip_gen: v7x
topology: tpu7x:2x2x1
jax: 0.10.0
libtpu: 0.0.40
codegen_flags: <defaults>
</compile_context>

<pallas_src>
import functools

import jax
import jax.numpy as jnp
from jax.experimental import pallas as pl
from jax.experimental.pallas import tpu as pltpu


# ---------------------------------------------------------------------------
# Fused encoder kernel: conv1(+ReLU) -> conv2(+ReLU) -> Linear, all in VMEM.
#
# Shapes (C1 = C2 = num_filters, P = conv1 output spatial = k*k, K = k*k,
#         O = 2*latent_size, L = latent_size):
#   pT_ref : (K, B*P)     conv1 patches, K on sublanes, (b, p) on lanes
#   w1_ref : (C1, K)      conv1 weight reshaped (Cout, Cin*KH*KW)
#   b1_ref : (C1, 1)
#   w2_ref : (C2, C1, P)  conv2 weight reshaped (Cout, Cin, KH*KW)
#   b2_ref : (C2, 1)
#   w3_ref : (C2, O)      Linear weight transposed (in_features, out_features)
#   b3_ref : (1, O)
#   mean_ref / logstd_ref : (B, L)  final consumer-layout outputs
# ---------------------------------------------------------------------------
def _fused_encoder_kernel(pT_ref, w1_ref, b1_ref, w2_ref, b2_ref,
                          w3_ref, b3_ref, mean_ref, logstd_ref):
    C2, C1, P = w2_ref.shape
    B, L = mean_ref.shape
    CH = 4  # conv2 output-channel chunk (keeps live values well under 64 vregs)

    # conv1 for the whole batch: one MXU matmul, bias + ReLU on the VPU.
    h1 = jnp.dot(w1_ref[...], pT_ref[...], preferred_element_type=jnp.float32)
    h1 = jnp.maximum(h1 + b1_ref[...], 0.0)                    # (C1, B*P)

    for b in range(B):                                          # B tiny & static
        h1_b = h1[:, b * P:(b + 1) * P]                         # (C1, P)
        row = b3_ref[...]                                       # (1, O) Linear acc
        for o0 in range(0, C2, CH):                             # conv2, chunked
            # conv2 chunk: (CH, C1, P) product, reduce sublane (C1) first,
            # then lane (P); never materializes the full (C2, C1, P) tensor.
            prod = w2_ref[o0:o0 + CH] * h1_b[None, :, :]        # (CH, C1, P)
            s = jnp.sum(prod, axis=1)                           # (CH, P)
            h2c = jnp.sum(s, axis=-1, keepdims=True) + b2_ref[o0:o0 + CH]
            h2c = jnp.maximum(h2c, 0.0)                         # (CH, 1)
            # Fold this chunk straight into the final Linear in ROW layout:
            # (CH, O) * (CH, 1) -> sublane reduce -> (1, O).
            row = row + jnp.sum(w3_ref[o0:o0 + CH, :] * h2c,
                                axis=0, keepdims=True)
        mean_ref[b:b + 1, :] = row[:, :L]
        logstd_ref[b:b + 1, :] = row[:, L:]


def _fused_encoder_call(pT, w1, b1, w2, b2, w3, b3, latent_size):
    K, BP = pT.shape
    C2, C1, P = w2.shape
    O = w3.shape[1]
    B = BP // P
    L = latent_size
    assert O == 2 * L and C2 % 4 == 0

    flops = 2 * C1 * K * BP + 2 * C2 * C1 * P * B + 2 * C2 * O * B
    bytes_accessed = 4 * (pT.size + w1.size + b1.size + w2.size + b2.size
                          + w3.size + b3.size + 2 * B * L)
    vmem = pl.BlockSpec(memory_space=pltpu.MemorySpace.VMEM)

    # Whole problem is <0.5 MiB: single invocation (no grid, no pipeline
    # scaffolding), whole-array VMEM blocks, tiny advisory cost estimate.
    return pl.pallas_call(
        _fused_encoder_kernel,
        out_shape=(jax.ShapeDtypeStruct((B, L), jnp.float32),
                   jax.ShapeDtypeStruct((B, L), jnp.float32)),
        in_specs=[vmem] * 7,
        out_specs=(vmem, vmem),
        cost_estimate=pl.CostEstimate(flops=flops, transcendentals=0,
                                      bytes_accessed=bytes_accessed),
    )(pT, w1, b1, w2, b2, w3, b3)


# ---------------------------------------------------------------------------
# VAE forward (== Encoder forward)
# ---------------------------------------------------------------------------
@functools.partial(jax.jit, static_argnames=("latent_size", "kernel_size"))
def vae_forward(x, packed, latent_size, kernel_size):
    """x: (B, 1, H, W) NCHW. Returns (latent_mean, latent_log_std), each (B, L)."""
    B = x.shape[0]
    # Single fused XLA op extracts conv1 patches directly in the transposed
    # "CNHW" layout -> (K, B, OH, OW); merging the trailing dims gives the
    # (K, B*P) slab the kernel consumes with no extra transpose or pad ops.
    patches = jax.lax.conv_general_dilated_patches(
        x, filter_shape=(kernel_size, kernel_size), window_strides=(2, 2),
        padding="VALID", dimension_numbers=("NCHW", "OIHW", "CNHW"))
    K, B2, OH, OW = patches.shape
    P = OH * OW
    # Fused kernel requires conv2's 10x10 kernel to cover its whole 10x10
    # input (true for the module's 28x28 / k=10 / 2-layer configuration).
    assert B2 == B and OH == OW == kernel_size
    assert packed["w2"].shape[-1] == P
    pT = patches.reshape(K, B * P)
    return _fused_encoder_call(pT, packed["w1"], packed["b1"],
                               packed["w2"], packed["b2"],
                               packed["w3"], packed["b3"], latent_size)


# ---------------------------------------------------------------------------
# Deterministic parameter init (PyTorch layouts) + one-time kernel repacking
# ---------------------------------------------------------------------------
def init_params(key, input_size, latent_size, num_layers,
                num_filters=32, kernel_size=10):
    """Conv2d weights: (Cout, Cin, KH, KW); Linear weight: (out, in)."""
    convs = []
    in_ch = 1
    s = input_size[0]
    for _ in range(num_layers):
        key, k1, k2 = jax.random.split(key, 3)
        fan_in = in_ch * kernel_size * kernel_size
        bound = 1.0 / jnp.sqrt(fan_in)
        w = jax.random.uniform(k1, (num_filters, in_ch, kernel_size, kernel_size),
                               jnp.float32, -bound, bound)
        b = jax.random.uniform(k2, (num_filters,), jnp.float32, -bound, bound)
        convs.append((w, b))
        in_ch = num_filters
        s = (s - (kernel_size - 1) - 1) // 2 + 1
    flat_dim = s * s * num_filters
    key, k1, k2 = jax.random.split(key, 3)
    bound = 1.0 / jnp.sqrt(flat_dim)
    lin_w = jax.random.uniform(k1, (2 * latent_size, flat_dim),
                               jnp.float32, -bound, bound)
    lin_b = jax.random.uniform(k2, (2 * latent_size,), jnp.float32, -bound, bound)
    return {"convs": convs, "lin_w": lin_w, "lin_b": lin_b}


def pack_params(params, kernel_size, num_filters):
    """One-time weight repacking for the fused kernel."""
    # The fused kernel supports exactly 2 conv layers with the second conv's
    # kernel covering its entire input (the module's 28x28/k=10 config).
    assert len(params["convs"]) == 2
    (w1, b1), (w2, b2) = params["convs"]
    cin = w1.shape[1]
    assert params["lin_w"].shape[1] == num_filters  # conv2 output is 1x1
    # TODO(synk): optionally pre-cast w1/w2 to bf16 (f32 accumulation stays in
    # the kernel) to halve the dominant DMA; kept f32 here for the 1e-3 check.
    return {
        "w1": w1.reshape(num_filters, cin * kernel_size * kernel_size),
        "b1": b1.reshape(-1, 1),
        "w2": w2.reshape(num_filters, num_filters, kernel_size * kernel_size),
        "b2": b2.reshape(-1, 1),
        "w3": params["lin_w"].T,                 # (in_features, out_features)
        "b3": params["lin_b"].reshape(1, -1),
    }


# ---------------------------------------------------------------------------
# Pure-JAX reference (for correctness check)
# ---------------------------------------------------------------------------
def ref_forward(x, params, latent_size):
    h = x
    for (w, b) in params["convs"]:
        h = jax.lax.conv_general_dilated(
            h, w, window_strides=(2, 2), padding="VALID",
            dimension_numbers=("NCHW", "OIHW", "NCHW"),
            precision=jax.lax.Precision.HIGHEST)
        h = jax.nn.relu(h + b.reshape(1, -1, 1, 1))
    flat = h.reshape(h.shape[0], -1)
    out = jnp.dot(flat, params["lin_w"].T,
                  precision=jax.lax.Precision.HIGHEST) + params["lin_b"]
    return out[:, :latent_size], out[:, latent_size:]


if __name__ == "__main__":
    # VAE(input_size=(28, 28), latent_size=8, num_encoder_layers=2, ...)
    input_size = (28, 28)
    latent_size = 8
    num_encoder_layers = 2
    kernel_size = 10
    num_filters = 32
    batch = 2

    key = jax.random.PRNGKey(0)
    key, pkey, xkey = jax.random.split(key, 3)
    params = init_params(pkey, input_size, latent_size, num_encoder_layers,
                         num_filters, kernel_size)
    packed = pack_params(params, kernel_size, num_filters)

    # NCHW input with 1 channel, like the PyTorch module expects.
    x = jax.random.uniform(xkey, (batch, 1, *input_size), jnp.float32)

    mean, log_std = vae_forward(x, packed, latent_size=latent_size,
                                kernel_size=kernel_size)
    jax.block_until_ready((mean, log_std))

    ref_mean, ref_log_std = ref_forward(x, params, latent_size)
    assert mean.shape == (batch, latent_size)
    assert log_std.shape == (batch, latent_size)
    assert jnp.allclose(mean, ref_mean, atol=1e-3, rtol=1e-3)
    assert jnp.allclose(log_std, ref_log_std, atol=1e-3, rtol=1e-3)

    print("KERNEL_OK")
</pallas_src>

<mosaic_0001>
module attributes {stable_mosaic.version = 11 : i64} {
  func.func @_fused_encoder_kernel(%arg0: memref<100x200xf32, #tpu.memory_space<vmem>>, %arg1: memref<32x100xf32, #tpu.memory_space<vmem>>, %arg2: memref<32x1xf32, #tpu.memory_space<vmem>>, %arg3: memref<32x32x100xf32, #tpu.memory_space<vmem>>, %arg4: memref<32x1xf32, #tpu.memory_space<vmem>>, %arg5: memref<32x16xf32, #tpu.memory_space<vmem>>, %arg6: memref<1x16xf32, #tpu.memory_space<vmem>>, %arg7: memref<2x8xf32, #tpu.memory_space<vmem>>, %arg8: memref<2x8xf32, #tpu.memory_space<vmem>>) attributes {dimension_semantics = [], scalar_prefetch = 0 : i64, scratch_operands = 0 : i64, tpu.core_type = #tpu.core_type<tc>} {
    %c0 = arith.constant 0 : index
    %c0_0 = arith.constant 0 : index
    %0 = vector.load %arg1[%c0, %c0_0] : memref<32x100xf32, #tpu.memory_space<vmem>>, vector<32x100xf32>
    %c0_1 = arith.constant 0 : index
    %c0_2 = arith.constant 0 : index
    %1 = vector.load %arg0[%c0_1, %c0_2] : memref<100x200xf32, #tpu.memory_space<vmem>>, vector<100x200xf32>
    %cst = arith.constant dense<0.000000e+00> : vector<32x200xf32>
    %2 = tpu.matmul %0, %1, %cst {dimension_numbers = #tpu.dot_dimension_numbers<[1], [0], [0], [1], [0, 0, 1, 1], [], []>} : vector<32x100xf32>, vector<100x200xf32>, vector<32x200xf32> -> vector<32x200xf32>
    %c0_3 = arith.constant 0 : index
    %c0_4 = arith.constant 0 : index
    %3 = vector.load %arg2[%c0_3, %c0_4] : memref<32x1xf32, #tpu.memory_space<vmem>>, vector<32x1xf32>
    %4 = vector.broadcast %3 : vector<32x1xf32> to vector<32x200xf32>
    %5 = arith.addf %2, %4 : vector<32x200xf32>
    %cst_5 = arith.constant 0.000000e+00 : f32
    %6 = vector.broadcast %cst_5 : f32 to vector<32x200xf32>
    %7 = arith.maximumf %5, %6 : vector<32x200xf32>
    %8 = vector.extract_strided_slice %7 {offsets = [0, 0], sizes = [32, 100], strides = [1, 1]} : vector<32x200xf32> to vector<32x100xf32>
    %c0_6 = arith.constant 0 : index
    %c0_7 = arith.constant 0 : index
    %9 = vector.load %arg6[%c0_6, %c0_7] : memref<1x16xf32, #tpu.memory_space<vmem>>, vector<1x16xf32>
    %c0_8 = arith.constant 0 : index
    %c0_9 = arith.constant 0 : index
    %c0_10 = arith.constant 0 : index
    %10 = vector.load %arg3[%c0_8, %c0_9, %c0_10] : memref<32x32x100xf32, #tpu.memory_space<vmem>>, vector<4x32x100xf32>
    %11 = vector.shape_cast %8 : vector<32x100xf32> to vector<1x32x100xf32>
    %12 = vector.broadcast %11 : vector<1x32x100xf32> to vector<4x32x100xf32>
    %13 = arith.mulf %10, %12 : vector<4x32x100xf32>
    %cst_11 = arith.constant dense<0.000000e+00> : vector<4x100xf32>
    %14 = vector.multi_reduction <add>, %13, %cst_11 [1] : vector<4x32x100xf32> to vector<4x100xf32>
    %cst_12 = arith.constant dense<0.000000e+00> : vector<4xf32>
    %15 = vector.multi_reduction <add>, %14, %cst_12 [1] : vector<4x100xf32> to vector<4xf32>
    %16 = vector.shape_cast %15 : vector<4xf32> to vector<4x1xf32>
    %c0_13 = arith.constant 0 : index
    %c0_14 = arith.constant 0 : index
    %17 = vector.load %arg4[%c0_13, %c0_14] : memref<32x1xf32, #tpu.memory_space<vmem>>, vector<4x1xf32>
    %18 = arith.addf %16, %17 : vector<4x1xf32>
    %cst_15 = arith.constant 0.000000e+00 : f32
    %19 = vector.broadcast %cst_15 : f32 to vector<4x1xf32>
    %20 = arith.maximumf %18, %19 : vector<4x1xf32>
    %c0_16 = arith.constant 0 : index
    %c0_17 = arith.constant 0 : index
    %21 = vector.load %arg5[%c0_16, %c0_17] : memref<32x16xf32, #tpu.memory_space<vmem>>, vector<4x16xf32>
    %22 = vector.broadcast %20 : vector<4x1xf32> to vector<4x16xf32>
    %23 = arith.mulf %21, %22 : vector<4x16xf32>
    %cst_18 = arith.constant dense<0.000000e+00> : vector<16xf32>
    %24 = vector.multi_reduction <add>, %23, %cst_18 [0] : vector<4x16xf32> to vector<16xf32>
    %25 = vector.shape_cast %24 : vector<16xf32> to vector<1x16xf32>
    %26 = arith.addf %9, %25 : vector<1x16xf32>
    %c4 = arith.constant 4 : index
    %c0_19 = arith.constant 0 : index
    %c0_20 = arith.constant 0 : index
    %27 = vector.load %arg3[%c4, %c0_19, %c0_20] : memref<32x32x100xf32, #tpu.memory_space<vmem>>, vector<4x32x100xf32>
    %28 = vector.shape_cast %8 : vector<32x100xf32> to vector<1x32x100xf32>
    %29 = vector.broadcast %28 : vector<1x32x100xf32> to vector<4x32x100xf32>
    %30 = arith.mulf %27, %29 : vector<4x32x100xf32>
    %cst_21 = arith.constant dense<0.000000e+00> : vector<4x100xf32>
    %31 = vector.multi_reduction <add>, %30, %cst_21 [1] : vector<4x32x100xf32> to vector<4x100xf32>
    %cst_22 = arith.constant dense<0.000000e+00> : vector<4xf32>
    %32 = vector.multi_reduction <add>, %31, %cst_22 [1] : vector<4x100xf32> to vector<4xf32>
    %33 = vector.shape_cast %32 : vector<4xf32> to vector<4x1xf32>
    %c4_23 = arith.constant 4 : index
    %c0_24 = arith.constant 0 : index
    %34 = vector.load %arg4[%c4_23, %c0_24] : memref<32x1xf32, #tpu.memory_space<vmem>>, vector<4x1xf32>
    %35 = arith.addf %33, %34 : vector<4x1xf32>
    %cst_25 = arith.constant 0.000000e+00 : f32
    %36 = vector.broadcast %cst_25 : f32 to vector<4x1xf32>
    %37 = arith.maximumf %35, %36 : vector<4x1xf32>
    %c4_26 = arith.constant 4 : index
    %c0_27 = arith.constant 0 : index
    %38 = vector.load %arg5[%c4_26, %c0_27] : memref<32x16xf32, #tpu.memory_space<vmem>>, vector<4x16xf32>
    %39 = vector.broadcast %37 : vector<4x1xf32> to vector<4x16xf32>
    %40 = arith.mulf %38, %39 : vector<4x16xf32>
    %cst_28 = arith.constant dense<0.000000e+00> : vector<16xf32>
    %41 = vector.multi_reduction <add>, %40, %cst_28 [0] : vector<4x16xf32> to vector<16xf32>
    %42 = vector.shape_cast %41 : vector<16xf32> to vector<1x16xf32>
    %43 = arith.addf %26, %42 : vector<1x16xf32>
    %c8 = arith.constant 8 : index
    %c0_29 = arith.constant 0 : index
    %c0_30 = arith.constant 0 : index
    %44 = vector.load %arg3[%c8, %c0_29, %c0_30] : memref<32x32x100xf32, #tpu.memory_space<vmem>>, vector<4x32x100xf32>
    %45 = vector.shape_cast %8 : vector<32x100xf32> to vector<1x32x100xf32>
    %46 = vector.broadcast %45 : vector<1x32x100xf32> to vector<4x32x100xf32>
    %47 = arith.mulf %44, %46 : vector<4x32x100xf32>
    %cst_31 = arith.constant dense<0.000000e+00> : vector<4x100xf32>
    %48 = vector.multi_reduction <add>, %47, %cst_31 [1] : vector<4x32x100xf32> to vector<4x100xf32>
    %cst_32 = arith.constant dense<0.000000e+00> : vector<4xf32>
    %49 = vector.multi_reduction <add>, %48, %cst_32 [1] : vector<4x100xf32> to vector<4xf32>
    %50 = vector.shape_cast %49 : vector<4xf32> to vector<4x1xf32>
    %c8_33 = arith.constant 8 : index
    %c0_34 = arith.constant 0 : index
    %51 = vector.load %arg4[%c8_33, %c0_34] : memref<32x1xf32, #tpu.memory_space<vmem>>, vector<4x1xf32>
    %52 = arith.addf %50, %51 : vector<4x1xf32>
    %cst_35 = arith.constant 0.000000e+00 : f32
    %53 = vector.broadcast %cst_35 : f32 to vector<4x1xf32>
    %54 = arith.maximumf %52, %53 : vector<4x1xf32>
    %c8_36 = arith.constant 8 : index
    %c0_37 = arith.constant 0 : index
    %55 = vector.load %arg5[%c8_36, %c0_37] : memref<32x16xf32, #tpu.memory_space<vmem>>, vector<4x16xf32>
    %56 = vector.broadcast %54 : vector<4x1xf32> to vector<4x16xf32>
    %57 = arith.mulf %55, %56 : vector<4x16xf32>
    %cst_38 = arith.constant dense<0.000000e+00> : vector<16xf32>
    %58 = vector.multi_reduction <add>, %57, %cst_38 [0] : vector<4x16xf32> to vector<16xf32>
    %59 = vector.shape_cast %58 : vector<16xf32> to vector<1x16xf32>
    %60 = arith.addf %43, %59 : vector<1x16xf32>
    %c12 = arith.constant 12 : index
    %c0_39 = arith.constant 0 : index
    %c0_40 = arith.constant 0 : index
    %61 = vector.load %arg3[%c12, %c0_39, %c0_40] : memref<32x32x100xf32, #tpu.memory_space<vmem>>, vector<4x32x100xf32>
    %62 = vector.shape_cast %8 : vector<32x100xf32> to vector<1x32x100xf32>
    %63 = vector.broadcast %62 : vector<1x32x100xf32> to vector<4x32x100xf32>
    %64 = arith.mulf %61, %63 : vector<4x32x100xf32>
    %cst_41 = arith.constant dense<0.000000e+00> : vector<4x100xf32>
    %65 = vector.multi_reduction <add>, %64, %cst_41 [1] : vector<4x32x100xf32> to vector<4x100xf32>
    %cst_42 = arith.constant dense<0.000000e+00> : vector<4xf32>
    %66 = vector.multi_reduction <add>, %65, %cst_42 [1] : vector<4x100xf32> to vector<4xf32>
    %67 = vector.shape_cast %66 : vector<4xf32> to vector<4x1xf32>
    %c12_43 = arith.constant 12 : index
    %c0_44 = arith.constant 0 : index
    %68 = vector.load %arg4[%c12_43, %c0_44] : memref<32x1xf32, #tpu.memory_space<vmem>>, vector<4x1xf32>
    %69 = arith.addf %67, %68 : vector<4x1xf32>
    %cst_45 = arith.constant 0.000000e+00 : f32
    %70 = vector.broadcast %cst_45 : f32 to vector<4x1xf32>
    %71 = arith.maximumf %69, %70 : vector<4x1xf32>
    %c12_46 = arith.constant 12 : index
    %c0_47 = arith.constant 0 : index
    %72 = vector.load %arg5[%c12_46, %c0_47] : memref<32x16xf32, #tpu.memory_space<vmem>>, vector<4x16xf32>
    %73 = vector.broadcast %71 : vector<4x1xf32> to vector<4x16xf32>
    %74 = arith.mulf %72, %73 : vector<4x16xf32>
    %cst_48 = arith.constant dense<0.000000e+00> : vector<16xf32>
    %75 = vector.multi_reduction <add>, %74, %cst_48 [0] : vector<4x16xf32> to vector<16xf32>
    %76 = vector.shape_cast %75 : vector<16xf32> to vector<1x16xf32>
    %77 = arith.addf %60, %76 : vector<1x16xf32>
    %c16 = arith.constant 16 : index
    %c0_49 = arith.constant 0 : index
    %c0_50 = arith.constant 0 : index
    %78 = vector.load %arg3[%c16, %c0_49, %c0_50] : memref<32x32x100xf32, #tpu.memory_space<vmem>>, vector<4x32x100xf32>
    %79 = vector.shape_cast %8 : vector<32x100xf32> to vector<1x32x100xf32>
    %80 = vector.broadcast %79 : vector<1x32x100xf32> to vector<4x32x100xf32>
    %81 = arith.mulf %78, %80 : vector<4x32x100xf32>
    %cst_51 = arith.constant dense<0.000000e+00> : vector<4x100xf32>
    %82 = vector.multi_reduction <add>, %81, %cst_51 [1] : vector<4x32x100xf32> to vector<4x100xf32>
    %cst_52 = arith.constant dense<0.000000e+00> : vector<4xf32>
    %83 = vector.multi_reduction <add>, %82, %cst_52 [1] : vector<4x100xf32> to vector<4xf32>
    %84 = vector.shape_cast %83 : vector<4xf32> to vector<4x1xf32>
    %c16_53 = arith.constant 16 : index
    %c0_54 = arith.constant 0 : index
    %85 = vector.load %arg4[%c16_53, %c0_54] : memref<32x1xf32, #tpu.memory_space<vmem>>, vector<4x1xf32>
    %86 = arith.addf %84, %85 : vector<4x1xf32>
    %cst_55 = arith.constant 0.000000e+00 : f32
    %87 = vector.broadcast %cst_55 : f32 to vector<4x1xf32>
    %88 = arith.maximumf %86, %87 : vector<4x1xf32>
    %c16_56 = arith.constant 16 : index
    %c0_57 = arith.constant 0 : index
    %89 = vector.load %arg5[%c16_56, %c0_57] : memref<32x16xf32, #tpu.memory_space<vmem>>, vector<4x16xf32>
    %90 = vector.broadcast %88 : vector<4x1xf32> to vector<4x16xf32>
    %91 = arith.mulf %89, %90 : vector<4x16xf32>
    %cst_58 = arith.constant dense<0.000000e+00> : vector<16xf32>
    %92 = vector.multi_reduction <add>, %91, %cst_58 [0] : vector<4x16xf32> to vector<16xf32>
    %93 = vector.shape_cast %92 : vector<16xf32> to vector<1x16xf32>
    %94 = arith.addf %77, %93 : vector<1x16xf32>
    %c20 = arith.constant 20 : index
    %c0_59 = arith.constant 0 : index
    %c0_60 = arith.constant 0 : index
    %95 = vector.load %arg3[%c20, %c0_59, %c0_60] : memref<32x32x100xf32, #tpu.memory_space<vmem>>, vector<4x32x100xf32>
    %96 = vector.shape_cast %8 : vector<32x100xf32> to vector<1x32x100xf32>
    %97 = vector.broadcast %96 : vector<1x32x100xf32> to vector<4x32x100xf32>
    %98 = arith.mulf %95, %97 : vector<4x32x100xf32>
    %cst_61 = arith.constant dense<0.000000e+00> : vector<4x100xf32>
    %99 = vector.multi_reduction <add>, %98, %cst_61 [1] : vector<4x32x100xf32> to vector<4x100xf32>
    %cst_62 = arith.constant dense<0.000000e+00> : vector<4xf32>
    %100 = vector.multi_reduction <add>, %99, %cst_62 [1] : vector<4x100xf32> to vector<4xf32>
    %101 = vector.shape_cast %100 : vector<4xf32> to vector<4x1xf32>
    %c20_63 = arith.constant 20 : index
    %c0_64 = arith.constant 0 : index
    %102 = vector.load %arg4[%c20_63, %c0_64] : memref<32x1xf32, #tpu.memory_space<vmem>>, vector<4x1xf32>
    %103 = arith.addf %101, %102 : vector<4x1xf32>
    %cst_65 = arith.constant 0.000000e+00 : f32
    %104 = vector.broadcast %cst_65 : f32 to vector<4x1xf32>
    %105 = arith.maximumf %103, %104 : vector<4x1xf32>
    %c20_66 = arith.constant 20 : index
    %c0_67 = arith.constant 0 : index
    %106 = vector.load %arg5[%c20_66, %c0_67] : memref<32x16xf32, #tpu.memory_space<vmem>>, vector<4x16xf32>
    %107 = vector.broadcast %105 : vector<4x1xf32> to vector<4x16xf32>
    %108 = arith.mulf %106, %107 : vector<4x16xf32>
    %cst_68 = arith.constant dense<0.000000e+00> : vector<16xf32>
    %109 = vector.multi_reduction <add>, %108, %cst_68 [0] : vector<4x16xf32> to vector<16xf32>
    %110 = vector.shape_cast %109 : vector<16xf32> to vector<1x16xf32>
    %111 = arith.addf %94, %110 : vector<1x16xf32>
    %c24 = arith.constant 24 : index
    %c0_69 = arith.constant 0 : index
    %c0_70 = arith.constant 0 : index
    %112 = vector.load %arg3[%c24, %c0_69, %c0_70] : memref<32x32x100xf32, #tpu.memory_space<vmem>>, vector<4x32x100xf32>
    %113 = vector.shape_cast %8 : vector<32x100xf32> to vector<1x32x100xf32>
    %114 = vector.broadcast %113 : vector<1x32x100xf32> to vector<4x32x100xf32>
    %115 = arith.mulf %112, %114 : vector<4x32x100xf32>
    %cst_71 = arith.constant dense<0.000000e+00> : vector<4x100xf32>
    %116 = vector.multi_reduction <add>, %115, %cst_71 [1] : vector<4x32x100xf32> to vector<4x100xf32>
    %cst_72 = arith.constant dense<0.000000e+00> : vector<4xf32>
    %117 = vector.multi_reduction <add>, %116, %cst_72 [1] : vector<4x100xf32> to vector<4xf32>
    %118 = vector.shape_cast %117 : vector<4xf32> to vector<4x1xf32>
    %c24_73 = arith.constant 24 : index
    %c0_74 = arith.constant 0 : index
    %119 = vector.load %arg4[%c24_73, %c0_74] : memref<32x1xf32, #tpu.memory_space<vmem>>, vector<4x1xf32>
    %120 = arith.addf %118, %119 : vector<4x1xf32>
    %cst_75 = arith.constant 0.000000e+00 : f32
    %121 = vector.broadcast %cst_75 : f32 to vector<4x1xf32>
    %122 = arith.maximumf %120, %121 : vector<4x1xf32>
    %c24_76 = arith.constant 24 : index
    %c0_77 = arith.constant 0 : index
    %123 = vector.load %arg5[%c24_76, %c0_77] : memref<32x16xf32, #tpu.memory_space<vmem>>, vector<4x16xf32>
    %124 = vector.broadcast %122 : vector<4x1xf32> to vector<4x16xf32>
    %125 = arith.mulf %123, %124 : vector<4x16xf32>
    %cst_78 = arith.constant dense<0.000000e+00> : vector<16xf32>
    %126 = vector.multi_reduction <add>, %125, %cst_78 [0] : vector<4x16xf32> to vector<16xf32>
    %127 = vector.shape_cast %126 : vector<16xf32> to vector<1x16xf32>
    %128 = arith.addf %111, %127 : vector<1x16xf32>
    %c28 = arith.constant 28 : index
    %c0_79 = arith.constant 0 : index
    %c0_80 = arith.constant 0 : index
    %129 = vector.load %arg3[%c28, %c0_79, %c0_80] : memref<32x32x100xf32, #tpu.memory_space<vmem>>, vector<4x32x100xf32>
    %130 = vector.shape_cast %8 : vector<32x100xf32> to vector<1x32x100xf32>
    %131 = vector.broadcast %130 : vector<1x32x100xf32> to vector<4x32x100xf32>
    %132 = arith.mulf %129, %131 : vector<4x32x100xf32>
    %cst_81 = arith.constant dense<0.000000e+00> : vector<4x100xf32>
    %133 = vector.multi_reduction <add>, %132, %cst_81 [1] : vector<4x32x100xf32> to vector<4x100xf32>
    %cst_82 = arith.constant dense<0.000000e+00> : vector<4xf32>
    %134 = vector.multi_reduction <add>, %133, %cst_82 [1] : vector<4x100xf32> to vector<4xf32>
    %135 = vector.shape_cast %134 : vector<4xf32> to vector<4x1xf32>
    %c28_83 = arith.constant 28 : index
    %c0_84 = arith.constant 0 : index
    %136 = vector.load %arg4[%c28_83, %c0_84] : memref<32x1xf32, #tpu.memory_space<vmem>>, vector<4x1xf32>
    %137 = arith.addf %135, %136 : vector<4x1xf32>
    %cst_85 = arith.constant 0.000000e+00 : f32
    %138 = vector.broadcast %cst_85 : f32 to vector<4x1xf32>
    %139 = arith.maximumf %137, %138 : vector<4x1xf32>
    %c28_86 = arith.constant 28 : index
    %c0_87 = arith.constant 0 : index
    %140 = vector.load %arg5[%c28_86, %c0_87] : memref<32x16xf32, #tpu.memory_space<vmem>>, vector<4x16xf32>
    %141 = vector.broadcast %139 : vector<4x1xf32> to vector<4x16xf32>
    %142 = arith.mulf %140, %141 : vector<4x16xf32>
    %cst_88 = arith.constant dense<0.000000e+00> : vector<16xf32>
    %143 = vector.multi_reduction <add>, %142, %cst_88 [0] : vector<4x16xf32> to vector<16xf32>
    %144 = vector.shape_cast %143 : vector<16xf32> to vector<1x16xf32>
    %145 = arith.addf %128, %144 : vector<1x16xf32>
    %146 = vector.extract_strided_slice %145 {offsets = [0, 0], sizes = [1, 8], strides = [1, 1]} : vector<1x16xf32> to vector<1x8xf32>
    %c0_89 = arith.constant 0 : index
    %c0_90 = arith.constant 0 : index
    %147 = vector.load %arg7[%c0_89, %c0_90] : memref<2x8xf32, #tpu.memory_space<vmem>>, vector<1x8xf32>
    tpu.vector_store %arg7[%c0_89, %c0_90], %146 {strides = array<i32>} : memref<2x8xf32, #tpu.memory_space<vmem>>, vector<1x8xf32>,
    %148 = vector.extract_strided_slice %145 {offsets = [0, 8], sizes = [1, 8], strides = [1, 1]} : vector<1x16xf32> to vector<1x8xf32>
    %c0_91 = arith.constant 0 : index
    %c0_92 = arith.constant 0 : index
    %149 = vector.load %arg8[%c0_91, %c0_92] : memref<2x8xf32, #tpu.memory_space<vmem>>, vector<1x8xf32>
    tpu.vector_store %arg8[%c0_91, %c0_92], %148 {strides = array<i32>} : memref<2x8xf32, #tpu.memory_space<vmem>>, vector<1x8xf32>,
    %150 = vector.extract_strided_slice %7 {offsets = [0, 100], sizes = [32, 100], strides = [1, 1]} : vector<32x200xf32> to vector<32x100xf32>
    %c0_93 = arith.constant 0 : index
    %c0_94 = arith.constant 0 : index
    %151 = vector.load %arg6[%c0_93, %c0_94] : memref<1x16xf32, #tpu.memory_space<vmem>>, vector<1x16xf32>
    %c0_95 = arith.constant 0 : index
    %c0_96 = arith.constant 0 : index
    %c0_97 = arith.constant 0 : index
    %152 = vector.load %arg3[%c0_95, %c0_96, %c0_97] : memref<32x32x100xf32, #tpu.memory_space<vmem>>, vector<4x32x100xf32>
    %153 = vector.shape_cast %150 : vector<32x100xf32> to vector<1x32x100xf32>
    %154 = vector.broadcast %153 : vector<1x32x100xf32> to vector<4x32x100xf32>
    %155 = arith.mulf %152, %154 : vector<4x32x100xf32>
    %cst_98 = arith.constant dense<0.000000e+00> : vector<4x100xf32>
    %156 = vector.multi_reduction <add>, %155, %cst_98 [1] : vector<4x32x100xf32> to vector<4x100xf32>
    %cst_99 = arith.constant dense<0.000000e+00> : vector<4xf32>
    %157 = vector.multi_reduction <add>, %156, %cst_99 [1] : vector<4x100xf32> to vector<4xf32>
    %158 = vector.shape_cast %157 : vector<4xf32> to vector<4x1xf32>
    %c0_100 = arith.constant 0 : index
    %c0_101 = arith.constant 0 : index
    %159 = vector.load %arg4[%c0_100, %c0_101] : memref<32x1xf32, #tpu.memory_space<vmem>>, vector<4x1xf32>
    %160 = arith.addf %158, %159 : vector<4x1xf32>
    %cst_102 = arith.constant 0.000000e+00 : f32
    %161 = vector.broadcast %cst_102 : f32 to vector<4x1xf32>
    %162 = arith.maximumf %160, %161 : vector<4x1xf32>
    %c0_103 = arith.constant 0 : index
    %c0_104 = arith.constant 0 : index
    %163 = vector.load %arg5[%c0_103, %c0_104] : memref<32x16xf32, #tpu.memory_space<vmem>>, vector<4x16xf32>
    %164 = vector.broadcast %162 : vector<4x1xf32> to vector<4x16xf32>
    %165 = arith.mulf %163, %164 : vector<4x16xf32>
    %cst_105 = arith.constant dense<0.000000e+00> : vector<16xf32>
    %166 = vector.multi_reduction <add>, %165, %cst_105 [0] : vector<4x16xf32> to vector<16xf32>
    %167 = vector.shape_cast %166 : vector<16xf32> to vector<1x16xf32>
    %168 = arith.addf %151, %167 : vector<1x16xf32>
    %c4_106 = arith.constant 4 : index
    %c0_107 = arith.constant 0 : index
    %c0_108 = arith.constant 0 : index
    %169 = vector.load %arg3[%c4_106, %c0_107, %c0_108] : memref<32x32x100xf32, #tpu.memory_space<vmem>>, vector<4x32x100xf32>
    %170 = vector.shape_cast %150 : vector<32x100xf32> to vector<1x32x100xf32>
    %171 = vector.broadcast %170 : vector<1x32x100xf32> to vector<4x32x100xf32>
    %172 = arith.mulf %169, %171 : vector<4x32x100xf32>
    %cst_109 = arith.constant dense<0.000000e+00> : vector<4x100xf32>
    %173 = vector.multi_reduction <add>, %172, %cst_109 [1] : vector<4x32x100xf32> to vector<4x100xf32>
    %cst_110 = arith.constant dense<0.000000e+00> : vector<4xf32>
    %174 = vector.multi_reduction <add>, %173, %cst_110 [1] : vector<4x100xf32> to vector<4xf32>
    %175 = vector.shape_cast %174 : vector<4xf32> to vector<4x1xf32>
    %c4_111 = arith.constant 4 : index
    %c0_112 = arith.constant 0 : index
    %176 = vector.load %arg4[%c4_111, %c0_112] : memref<32x1xf32, #tpu.memory_space<vmem>>, vector<4x1xf32>
    %177 = arith.addf %175, %176 : vector<4x1xf32>
    %cst_113 = arith.constant 0.000000e+00 : f32
    %178 = vector.broadcast %cst_113 : f32 to vector<4x1xf32>
    %179 = arith.maximumf %177, %178 : vector<4x1xf32>
    %c4_114 = arith.constant 4 : index
    %c0_115 = arith.constant 0 : index
    %180 = vector.load %arg5[%c4_114, %c0_115] : memref<32x16xf32, #tpu.memory_space<vmem>>, vector<4x16xf32>
    %181 = vector.broadcast %179 : vector<4x1xf32> to vector<4x16xf32>
    %182 = arith.mulf %180, %181 : vector<4x16xf32>
    %cst_116 = arith.constant dense<0.000000e+00> : vector<16xf32>
    %183 = vector.multi_reduction <add>, %182, %cst_116 [0] : vector<4x16xf32> to vector<16xf32>
    %184 = vector.shape_cast %183 : vector<16xf32> to vector<1x16xf32>
    %185 = arith.addf %168, %184 : vector<1x16xf32>
    %c8_117 = arith.constant 8 : index
    %c0_118 = arith.constant 0 : index
    %c0_119 = arith.constant 0 : index
    %186 = vector.load %arg3[%c8_117, %c0_118, %c0_119] : memref<32x32x100xf32, #tpu.memory_space<vmem>>, vector<4x32x100xf32>
    %187 = vector.shape_cast %150 : vector<32x100xf32> to vector<1x32x100xf32>
    %188 = vector.broadcast %187 : vector<1x32x100xf32> to vector<4x32x100xf32>
    %189 = arith.mulf %186, %188 : vector<4x32x100xf32>
    %cst_120 = arith.constant dense<0.000000e+00> : vector<4x100xf32>
    %190 = vector.multi_reduction <add>, %189, %cst_120 [1] : vector<4x32x100xf32> to vector<4x100xf32>
    %cst_121 = arith.constant dense<0.000000e+00> : vector<4xf32>
    %191 = vector.multi_reduction <add>, %190, %cst_121 [1] : vector<4x100xf32> to vector<4xf32>
    %192 = vector.shape_cast %191 : vector<4xf32> to vector<4x1xf32>
    %c8_122 = arith.constant 8 : index
    %c0_123 = arith.constant 0 : index
    %193 = vector.load %arg4[%c8_122, %c0_123] : memref<32x1xf32, #tpu.memory_space<vmem>>, vector<4x1xf32>
    %194 = arith.addf %192, %193 : vector<4x1xf32>
    %cst_124 = arith.constant 0.000000e+00 : f32
    %195 = vector.broadcast %cst_124 : f32 to vector<4x1xf32>
    %196 = arith.maximumf %194, %195 : vector<4x1xf32>
    %c8_125 = arith.constant 8 : index
    %c0_126 = arith.constant 0 : index
    %197 = vector.load %arg5[%c8_125, %c0_126] : memref<32x16xf32, #tpu.memory_space<vmem>>, vector<4x16xf32>
    %198 = vector.broadcast %196 : vector<4x1xf32> to vector<4x16xf32>
    %199 = arith.mulf %197, %198 : vector<4x16xf32>
    %cst_127 = arith.constant dense<0.000000e+00> : vector<16xf32>
    %200 = vector.multi_reduction <add>, %199, %cst_127 [0] : vector<4x16xf32> to vector<16xf32>
    %201 = vector.shape_cast %200 : vector<16xf32> to vector<1x16xf32>
    %202 = arith.addf %185, %201 : vector<1x16xf32>
    %c12_128 = arith.constant 12 : index
    %c0_129 = arith.constant 0 : index
    %c0_130 = arith.constant 0 : index
    %203 = vector.load %arg3[%c12_128, %c0_129, %c0_130] : memref<32x32x100xf32, #tpu.memory_space<vmem>>, vector<4x32x100xf32>
    %204 = vector.shape_cast %150 : vector<32x100xf32> to vector<1x32x100xf32>
    %205 = vector.broadcast %204 : vector<1x32x100xf32> to vector<4x32x100xf32>
    %206 = arith.mulf %203, %205 : vector<4x32x100xf32>
    %cst_131 = arith.constant dense<0.000000e+00> : vector<4x100xf32>
    %207 = vector.multi_reduction <add>, %206, %cst_131 [1] : vector<4x32x100xf32> to vector<4x100xf32>
    %cst_132 = arith.constant dense<0.000000e+00> : vector<4xf32>
    %208 = vector.multi_reduction <add>, %207, %cst_132 [1] : vector<4x100xf32> to vector<4xf32>
    %209 = vector.shape_cast %208 : vector<4xf32> to vector<4x1xf32>
    %c12_133 = arith.constant 12 : index
    %c0_134 = arith.constant 0 : index
    %210 = vector.load %arg4[%c12_133, %c0_134] : memref<32x1xf32, #tpu.memory_space<vmem>>, vector<4x1xf32>
    %211 = arith.addf %209, %210 : vector<4x1xf32>
    %cst_135 = arith.constant 0.000000e+00 : f32
    %212 = vector.broadcast %cst_135 : f32 to vector<4x1xf32>
    %213 = arith.maximumf %211, %212 : vector<4x1xf32>
    %c12_136 = arith.constant 12 : index
    %c0_137 = arith.constant 0 : index
    %214 = vector.load %arg5[%c12_136, %c0_137] : memref<32x16xf32, #tpu.memory_space<vmem>>, vector<4x16xf32>
    %215 = vector.broadcast %213 : vector<4x1xf32> to vector<4x16xf32>
    %216 = arith.mulf %214, %215 : vector<4x16xf32>
    %cst_138 = arith.constant dense<0.000000e+00> : vector<16xf32>
    %217 = vector.multi_reduction <add>, %216, %cst_138 [0] : vector<4x16xf32> to vector<16xf32>
    %218 = vector.shape_cast %217 : vector<16xf32> to vector<1x16xf32>
    %219 = arith.addf %202, %218 : vector<1x16xf32>
    %c16_139 = arith.constant 16 : index
    %c0_140 = arith.constant 0 : index
    %c0_141 = arith.constant 0 : index
    %220 = vector.load %arg3[%c16_139, %c0_140, %c0_141] : memref<32x32x100xf32, #tpu.memory_space<vmem>>, vector<4x32x100xf32>
    %221 = vector.shape_cast %150 : vector<32x100xf32> to vector<1x32x100xf32>
    %222 = vector.broadcast %221 : vector<1x32x100xf32> to vector<4x32x100xf32>
    %223 = arith.mulf %220, %222 : vector<4x32x100xf32>
    %cst_142 = arith.constant dense<0.000000e+00> : vector<4x100xf32>
    %224 = vector.multi_reduction <add>, %223, %cst_142 [1] : vector<4x32x100xf32> to vector<4x100xf32>
    %cst_143 = arith.constant dense<0.000000e+00> : vector<4xf32>
    %225 = vector.multi_reduction <add>, %224, %cst_143 [1] : vector<4x100xf32> to vector<4xf32>
    %226 = vector.shape_cast %225 : vector<4xf32> to vector<4x1xf32>
    %c16_144 = arith.constant 16 : index
    %c0_145 = arith.constant 0 : index
    %227 = vector.load %arg4[%c16_144, %c0_145] : memref<32x1xf32, #tpu.memory_space<vmem>>, vector<4x1xf32>
    %228 = arith.addf %226, %227 : vector<4x1xf32>
    %cst_146 = arith.constant 0.000000e+00 : f32
    %229 = vector.broadcast %cst_146 : f32 to vector<4x1xf32>
    %230 = arith.maximumf %228, %229 : vector<4x1xf32>
    %c16_147 = arith.constant 16 : index
    %c0_148 = arith.constant 0 : index
    %231 = vector.load %arg5[%c16_147, %c0_148] : memref<32x16xf32, #tpu.memory_space<vmem>>, vector<4x16xf32>
    %232 = vector.broadcast %230 : vector<4x1xf32> to vector<4x16xf32>
    %233 = arith.mulf %231, %232 : vector<4x16xf32>
    %cst_149 = arith.constant dense<0.000000e+00> : vector<16xf32>
    %234 = vector.multi_reduction <add>, %233, %cst_149 [0] : vector<4x16xf32> to vector<16xf32>
    %235 = vector.shape_cast %234 : vector<16xf32> to vector<1x16xf32>
    %236 = arith.addf %219, %235 : vector<1x16xf32>
    %c20_150 = arith.constant 20 : index
    %c0_151 = arith.constant 0 : index
    %c0_152 = arith.constant 0 : index
    %237 = vector.load %arg3[%c20_150, %c0_151, %c0_152] : memref<32x32x100xf32, #tpu.memory_space<vmem>>, vector<4x32x100xf32>
    %238 = vector.shape_cast %150 : vector<32x100xf32> to vector<1x32x100xf32>
    %239 = vector.broadcast %238 : vector<1x32x100xf32> to vector<4x32x100xf32>
    %240 = arith.mulf %237, %239 : vector<4x32x100xf32>
    %cst_153 = arith.constant dense<0.000000e+00> : vector<4x100xf32>
    %241 = vector.multi_reduction <add>, %240, %cst_153 [1] : vector<4x32x100xf32> to vector<4x100xf32>
    %cst_154 = arith.constant dense<0.000000e+00> : vector<4xf32>
    %242 = vector.multi_reduction <add>, %241, %cst_154 [1] : vector<4x100xf32> to vector<4xf32>
    %243 = vector.shape_cast %242 : vector<4xf32> to vector<4x1xf32>
    %c20_155 = arith.constant 20 : index
    %c0_156 = arith.constant 0 : index
    %244 = vector.load %arg4[%c20_155, %c0_156] : memref<32x1xf32, #tpu.memory_space<vmem>>, vector<4x1xf32>
    %245 = arith.addf %243, %244 : vector<4x1xf32>
    %cst_157 = arith.constant 0.000000e+00 : f32
    %246 = vector.broadcast %cst_157 : f32 to vector<4x1xf32>
    %247 = arith.maximumf %245, %246 : vector<4x1xf32>
    %c20_158 = arith.constant 20 : index
    %c0_159 = arith.constant 0 : index
    %248 = vector.load %arg5[%c20_158, %c0_159] : memref<32x16xf32, #tpu.memory_space<vmem>>, vector<4x16xf32>
    %249 = vector.broadcast %247 : vector<4x1xf32> to vector<4x16xf32>
    %250 = arith.mulf %248, %249 : vector<4x16xf32>
    %cst_160 = arith.constant dense<0.000000e+00> : vector<16xf32>
    %251 = vector.multi_reduction <add>, %250, %cst_160 [0] : vector<4x16xf32> to vector<16xf32>
    %252 = vector.shape_cast %251 : vector<16xf32> to vector<1x16xf32>
    %253 = arith.addf %236, %252 : vector<1x16xf32>
    %c24_161 = arith.constant 24 : index
    %c0_162 = arith.constant 0 : index
    %c0_163 = arith.constant 0 : index
    %254 = vector.load %arg3[%c24_161, %c0_162, %c0_163] : memref<32x32x100xf32, #tpu.memory_space<vmem>>, vector<4x32x100xf32>
    %255 = vector.shape_cast %150 : vector<32x100xf32> to vector<1x32x100xf32>
    %256 = vector.broadcast %255 : vector<1x32x100xf32> to vector<4x32x100xf32>
    %257 = arith.mulf %254, %256 : vector<4x32x100xf32>
    %cst_164 = arith.constant dense<0.000000e+00> : vector<4x100xf32>
    %258 = vector.multi_reduction <add>, %257, %cst_164 [1] : vector<4x32x100xf32> to vector<4x100xf32>
    %cst_165 = arith.constant dense<0.000000e+00> : vector<4xf32>
    %259 = vector.multi_reduction <add>, %258, %cst_165 [1] : vector<4x100xf32> to vector<4xf32>
    %260 = vector.shape_cast %259 : vector<4xf32> to vector<4x1xf32>
    %c24_166 = arith.constant 24 : index
    %c0_167 = arith.constant 0 : index
    %261 = vector.load %arg4[%c24_166, %c0_167] : memref<32x1xf32, #tpu.memory_space<vmem>>, vector<4x1xf32>
    %262 = arith.addf %260, %261 : vector<4x1xf32>
    %cst_168 = arith.constant 0.000000e+00 : f32
    %263 = vector.broadcast %cst_168 : f32 to vector<4x1xf32>
    %264 = arith.maximumf %262, %263 : vector<4x1xf32>
    %c24_169 = arith.constant 24 : index
    %c0_170 = arith.constant 0 : index
    %265 = vector.load %arg5[%c24_169, %c0_170] : memref<32x16xf32, #tpu.memory_space<vmem>>, vector<4x16xf32>
    %266 = vector.broadcast %264 : vector<4x1xf32> to vector<4x16xf32>
    %267 = arith.mulf %265, %266 : vector<4x16xf32>
    %cst_171 = arith.constant dense<0.000000e+00> : vector<16xf32>
    %268 = vector.multi_reduction <add>, %267, %cst_171 [0] : vector<4x16xf32> to vector<16xf32>
    %269 = vector.shape_cast %268 : vector<16xf32> to vector<1x16xf32>
    %270 = arith.addf %253, %269 : vector<1x16xf32>
    %c28_172 = arith.constant 28 : index
    %c0_173 = arith.constant 0 : index
    %c0_174 = arith.constant 0 : index
    %271 = vector.load %arg3[%c28_172, %c0_173, %c0_174] : memref<32x32x100xf32, #tpu.memory_space<vmem>>, vector<4x32x100xf32>
    %272 = vector.shape_cast %150 : vector<32x100xf32> to vector<1x32x100xf32>
    %273 = vector.broadcast %272 : vector<1x32x100xf32> to vector<4x32x100xf32>
    %274 = arith.mulf %271, %273 : vector<4x32x100xf32>
    %cst_175 = arith.constant dense<0.000000e+00> : vector<4x100xf32>
    %275 = vector.multi_reduction <add>, %274, %cst_175 [1] : vector<4x32x100xf32> to vector<4x100xf32>
    %cst_176 = arith.constant dense<0.000000e+00> : vector<4xf32>
    %276 = vector.multi_reduction <add>, %275, %cst_176 [1] : vector<4x100xf32> to vector<4xf32>
    %277 = vector.shape_cast %276 : vector<4xf32> to vector<4x1xf32>
    %c28_177 = arith.constant 28 : index
    %c0_178 = arith.constant 0 : index
    %278 = vector.load %arg4[%c28_177, %c0_178] : memref<32x1xf32, #tpu.memory_space<vmem>>, vector<4x1xf32>
    %279 = arith.addf %277, %278 : vector<4x1xf32>
    %cst_179 = arith.constant 0.000000e+00 : f32
    %280 = vector.broadcast %cst_179 : f32 to vector<4x1xf32>
    %281 = arith.maximumf %279, %280 : vector<4x1xf32>
    %c28_180 = arith.constant 28 : index
    %c0_181 = arith.constant 0 : index
    %282 = vector.load %arg5[%c28_180, %c0_181] : memref<32x16xf32, #tpu.memory_space<vmem>>, vector<4x16xf32>
    %283 = vector.broadcast %281 : vector<4x1xf32> to vector<4x16xf32>
    %284 = arith.mulf %282, %283 : vector<4x16xf32>
    %cst_182 = arith.constant dense<0.000000e+00> : vector<16xf32>
    %285 = vector.multi_reduction <add>, %284, %cst_182 [0] : vector<4x16xf32> to vector<16xf32>
    %286 = vector.shape_cast %285 : vector<16xf32> to vector<1x16xf32>
    %287 = arith.addf %270, %286 : vector<1x16xf32>
    %288 = vector.extract_strided_slice %287 {offsets = [0, 0], sizes = [1, 8], strides = [1, 1]} : vector<1x16xf32> to vector<1x8xf32>
    %c1 = arith.constant 1 : index
    %c0_183 = arith.constant 0 : index
    %289 = vector.load %arg7[%c1, %c0_183] : memref<2x8xf32, #tpu.memory_space<vmem>>, vector<1x8xf32>
    tpu.vector_store %arg7[%c1, %c0_183], %288 {strides = array<i32>} : memref<2x8xf32, #tpu.memory_space<vmem>>, vector<1x8xf32>,
    %290 = vector.extract_strided_slice %287 {offsets = [0, 8], sizes = [1, 8], strides = [1, 1]} : vector<1x16xf32> to vector<1x8xf32>
    %c1_184 = arith.constant 1 : index
    %c0_185 = arith.constant 0 : index
    %291 = vector.load %arg8[%c1_184, %c0_185] : memref<2x8xf32, #tpu.memory_space<vmem>>, vector<1x8xf32>
    tpu.vector_store %arg8[%c1_184, %c0_185], %290 {strides = array<i32>} : memref<2x8xf32, #tpu.memory_space<vmem>>, vector<1x8xf32>,
    return
  }
}

</mosaic_0001>

<llo_original>
// kernel: vae_forward.1
$region0: #{vae_forward.1}
  #allocation0 [shape = 'u32[]', space=smem, size = 0x4, offset = 0x4, fixed_abs, tag = 'smem constant byte address 0x4 - core index']
  #allocation1 [shape = 'u32[144,128]{1,0:T(1,128)}', space=vmem, size = 0x12000, scoped, tag = 'internal scratch']
  %s0 = inlined_call_operand.vmem [shape: f32[100,200], index: 0, kind: input, shape index: {}]
  %s1 = inlined_call_operand.vmem [shape: f32[32,100], index: 1, kind: input, shape index: {}]
  %s2 = inlined_call_operand.vmem [shape: f32[32,1], index: 2, kind: input, shape index: {}]
  %s3 = inlined_call_operand.vmem [shape: f32[32,32,100], index: 3, kind: input, shape index: {}]
  %s4 = inlined_call_operand.vmem [shape: f32[32,1], index: 4, kind: input, shape index: {}]
  %s5 = inlined_call_operand.vmem [shape: f32[32,16], index: 5, kind: input, shape index: {}]
  %s6 = inlined_call_operand.vmem [shape: f32[1,16], index: 6, kind: input, shape index: {}]
  %s7 = inlined_call_operand.hbm [shape: f32[2,8], index: 7, kind: output, shape index: {0}]
  %s8 = inlined_call_operand.hbm [shape: f32[2,8], index: 8, kind: output, shape index: {1}]
  %9 = xla_tuple %s7, %s8
  %s10 = sld [smem:[#allocation0]]
  $region46: #{vae_forward.1} parent=0
    _
  %s12 = ssub.s32 1, %s10
  %s13 = scalar_select 0, %s12, %s10
  $region1: #{vae_forward.1} parent=0
    #allocation2 [shape = 'u8[1024]{0}', space=vmem, size = 0x400, scoped, tag = 'output window, operand 0, single buffered']
    #allocation3 [shape = 's32[1]{0}', space=sflag, size = 0x4, scoped, tag = 'scoped memory for vae_forward.1']
    #allocation4 [shape = 'u8[1024]{0}', space=vmem, size = 0x400, scoped, tag = 'output window, operand 1, single buffered']
    #allocation5 [shape = 's32[1]{0}', space=sflag, size = 0x4, scoped, tag = 'scoped memory for vae_forward.1']
    %14 = vsyncpa [#allocation3], 0
    %15 = vsyncpa [#allocation5], 0
    // Predicated region
    $region2: #{vae_forward.1} parent=1 // pred_check
      _
    $region3: #{vae_forward.1} parent=1 // pred_check_branch
      %17 = sbr.rel (0) target = $region5
    $region4: #{vae_forward.1} parent=1 // pred_region
      _
    $region5: #{vae_forward.1} parent=1 // pred_fallthru
      _
    // Predicated region
    $region6: #{vae_forward.1} parent=1 // pred_check
      _
    $region7: #{vae_forward.1} parent=1 // pred_check_branch
      %19 = sbr.rel (0) target = $region9
    $region8: #{vae_forward.1} parent=1 // pred_region
      _
    $region9: #{vae_forward.1} parent=1 // pred_fallthru
      _
    // Predicated region
    $region10: #{vae_forward.1} parent=1 // pred_check
      _
    $region11: #{vae_forward.1} parent=1 // pred_check_branch
      %21 = sbr.rel (0) target = $region13
    $region12: #{vae_forward.1} parent=1 // pred_region
      _
    $region13: #{vae_forward.1} parent=1 // pred_fallthru
      _
    // Predicated region
    $region14: #{vae_forward.1} parent=1 // pred_check
      _
    $region15: #{vae_forward.1} parent=1 // pred_check_branch
      %23 = sbr.rel (0) target = $region17
    $region16: #{vae_forward.1} parent=1 // pred_region
      _
    $region17: #{vae_forward.1} parent=1 // pred_fallthru
      _
    // Predicated region
    $region18: #{vae_forward.1} parent=1 // pred_check
      _
    $region19: #{vae_forward.1} parent=1 // pred_check_branch
      %25 = sbr.rel (0) target = $region21
    $region20: #{vae_forward.1} parent=1 // pred_region
      _
    $region21: #{vae_forward.1} parent=1 // pred_fallthru
      _
    // Predicated region
    $region22: #{vae_forward.1} parent=1 // pred_check
      _
    $region23: #{vae_forward.1} parent=1 // pred_check_branch
      %27 = sbr.rel (0) target = $region25
    $region24: #{vae_forward.1} parent=1 // pred_region
      _
    $region25: #{vae_forward.1} parent=1 // pred_fallthru
      _
    // Predicated region
    $region26: #{vae_forward.1} parent=1 // pred_check
      _
    $region27: #{vae_forward.1} parent=1 // pred_check_branch
      %29 = sbr.rel (0) target = $region29
    $region28: #{vae_forward.1} parent=1 // pred_region
      _
    $region29: #{vae_forward.1} parent=1 // pred_fallthru
      _
    %v30 = vld [vmem:[%s1] sm:$0xff]
    %v31 = vld [vmem:[%s1 + $0x8] sm:$0xff]
    %v32 = vld [vmem:[%s1 + $0x10] sm:$0xff]
    %v33 = vld [vmem:[%s1 + $0x18] sm:$0xff]
    %v34 = vld [vmem:[%s0] sm:$0xff]
    %v35 = vld [vmem:[%s0 + $0x8] sm:$0xff]
    %v36 = vld [vmem:[%s0 + $0x10] sm:$0xff]
    %v37 = vld [vmem:[%s0 + $0x18] sm:$0xff]
    %v38 = vld [vmem:[%s0 + $0x20] sm:$0xff]
    %v39 = vld [vmem:[%s0 + $0x28] sm:$0xff]
    %v40 = vld [vmem:[%s0 + $0x30] sm:$0xff]
    %v41 = vld [vmem:[%s0 + $0x38] sm:$0xff]
    %v42 = vld [vmem:[%s0 + $0x40] sm:$0xff]
    %v43 = vld [vmem:[%s0 + $0x48] sm:$0xff]
    %v44 = vld [vmem:[%s0 + $0x50] sm:$0xff]
    %v45 = vld [vmem:[%s0 + $0x58] sm:$0xff]
    %v46 = vld [vmem:[%s0 + $0x60] sm:$0xff]
    %v47 = vld [vmem:[%s0 + $0x68] sm:$0xff]
    %v48 = vld [vmem:[%s0 + $0x70] sm:$0xff]
    %v49 = vld [vmem:[%s0 + $0x78] sm:$0xff]
    %v50 = vld [vmem:[%s0 + $0x80] sm:$0xff]
    %v51 = vld [vmem:[%s0 + $0x88] sm:$0xff]
    %v52 = vld [vmem:[%s0 + $0x90] sm:$0xff]
    %v53 = vld [vmem:[%s0 + $0x98] sm:$0xff]
    %v54 = vld [vmem:[%s0 + $0xa0] sm:$0xff]
    %v55 = vld [vmem:[%s0 + $0xa8] sm:$0xff]
    %v56 = vld [vmem:[%s0 + $0xb0] sm:$0xff]
    %v57 = vld [vmem:[%s0 + $0xb8] sm:$0xff]
    %v58 = vld [vmem:[%s0 + $0xc0] sm:$0xf]
    %v59 = vld [vmem:[%s0 + $0xc8] sm:$0xf]
    %v60 = vld [vmem:[%s2] sm:$0xff]
    %v61 = vld [vmem:[%s2 + $0x8] sm:$0xff]
    %v62 = vld [vmem:[%s2 + $0x10] sm:$0xff]
    %v63 = vld [vmem:[%s2 + $0x18] sm:$0xff]
    %65 = vset.pattern.permute.xlu0 0
    %66 = vperm.xlu0 %65, %v60
    %v67 = vpop.permute.xlu0 %66
    %70 = vset.pattern.permute.xlu0 0
    %71 = vperm.xlu0 %70, %v61
    %v72 = vpop.permute.xlu0 %71
    %75 = vset.pattern.permute.xlu0 0
    %76 = vperm.xlu0 %75, %v62
    %v77 = vpop.permute.xlu0 %76
    %80 = vset.pattern.permute.xlu0 0
    %81 = vperm.xlu0 %80, %v63
    %v82 = vpop.permute.xlu0 %81
    %vm84 = vcmask 818176
    %v86 = vsel %vm84, %v30, 0
    %v89 = vsel %vm84, %v31, 0
    %v92 = vsel %vm84, %v32, 0
    %v95 = vsel %vm84, %v33, 0
    %vm97 = vcmask 1043456
    %v99 = vsel %vm97, %v58, 0
    %v102 = vsel %vm97, %v59, 0
    %104 = vmatprep.subr.mxu0 %v35
    %105 = vmatpush1.msra.mxu0 %v34
    %106 = vmatprep.subr.mxu0 %v37
    %107 = vmatpush1.msra.mxu0 %v36
    %108 = vmatprep.subr.mxu0 %v39
    %109 = vmatpush1.msra.mxu0 %v38
    %110 = vmatprep.subr.mxu0 %v41
    %111 = vmatpush1.msra.mxu0 %v40
    %112 = vmatprep.subr.mxu0 %v43
    %113 = vmatpush1.msra.mxu0 %v42
    %114 = vmatprep.subr.mxu0 %v45
    %115 = vmatpush1.msra.mxu0 %v44
    %116 = vmatprep.subr.mxu0 %v47
    %117 = vmatpush1.msra.mxu0 %v46
    %118 = vmatprep.subr.mxu0 %v49
    %119 = vmatpush1.msra.mxu0 %v48
    %120 = vmatprep.subr.mxu0 %v51
    %121 = vmatpush1.msra.mxu0 %v50
    %122 = vmatprep.subr.mxu0 %v53
    %123 = vmatpush1.msra.mxu0 %v52
    %124 = vmatprep.subr.mxu0 %v55
    %125 = vmatpush1.msra.mxu0 %v54
    %126 = vmatprep.subr.mxu0 %v57
    %127 = vmatpush1.msra.mxu0 %v56
    %128 = vmatprep.subr.mxu0 %v102
    %129 = vmatpush1.msra.mxu0 %v99
    %130 = vmatprep.subr.mxu0 0.0
    %131 = vmatpush1.msra.mxu0 0.0
    %132 = vmatprep.subr.mxu0 0.0
    %133 = vmatpush1.msra.mxu0 0.0
    %134 = vmatprep.subr.mxu0 0.0
    %135 = vmatpush1.msra.mxu0 0.0
    %136 = vmatprep.subr.mxu0 0.0
    %137 = vmatpush1.msra.mxu0 0.0
    %138 = vmatprep.subr.mxu0 0.0
    %139 = vmatpush1.msra.mxu0 0.0
    %140 = vmatprep.subr.mxu0 0.0
    %141 = vmatpush1.msra.mxu0 0.0
    %142 = vmatprep.subr.mxu0 0.0
    %143 = vmatpush1.msra.mxu0 0.0
    %144 = vmatprep.subr.mxu0 0.0
    %145 = vmatpush1.msra.mxu0 0.0
    %146 = vmatprep.subr.mxu0 0.0
    %147 = vmatpush1.msra.mxu0 0.0
    %148 = vmatprep.subr.mxu0 0.0
    %149 = vmatpush1.msra.mxu0 0.0
    %150 = vmatprep.subr.mxu0 0.0
    %151 = vmatpush1.msra.mxu0 0.0
    %152 = vmatprep.subr.mxu0 0.0
    %153 = vmatpush1.msra.mxu0 0.0
    %154 = vmatprep.subr.mxu0 0.0
    %155 = vmatpush1.msra.mxu0 0.0
    %156 = vmatprep.subr.mxu0 0.0
    %157 = vmatpush1.msra.mxu0 0.0
    %158 = vmatprep.subr.mxu0 0.0
    %159 = vmatpush1.msra.mxu0 0.0
    %160 = vmatprep.subr.mxu0 0.0
    %161 = vmatpush1.msra.mxu0 0.0
    %162 = vmatprep.subr.mxu0 0.0
    %163 = vmatpush1.msra.mxu0 0.0
    %164 = vmatprep.subr.mxu0 0.0
    %165 = vmatpush1.msra.mxu0 0.0
    %166 = vmatprep.subr.mxu0 0.0
    %167 = vmatpush1.msra.mxu0 0.0
    %168 = vmatprep.mubr.f32.mxu0 0.0
    %169 = vmatmul.mubr.f32.gmra.mrb[0].mxu0 %v86
    %v170 = vpop.f32.mrb[0].mxu0
    %v171 = vadd.f32 %v67, %v170
    %v172 = vpop.f32.mrb[0].mxu0
    %v173 = vadd.f32 %v67, %v172
    %174 = vmatprep.mubr.f32.mxu0 0.0
    %175 = vmatmul.mubr.f32.gmra.mrb[0].mxu0 %v89
    %v176 = vpop.f32.mrb[0].mxu0
    %v177 = vadd.f32 %v72, %v176
    %v178 = vpop.f32.mrb[0].mxu0
    %v179 = vadd.f32 %v72, %v178
    %180 = vmatprep.mubr.f32.mxu0 0.0
    %181 = vmatmul.mubr.f32.gmra.mrb[0].mxu0 %v92
    %v182 = vpop.f32.mrb[0].mxu0
    %v183 = vadd.f32 %v77, %v182
    %v184 = vpop.f32.mrb[0].mxu0
    %v185 = vadd.f32 %v77, %v184
    %186 = vmatprep.mubr.f32.mxu0 0.0
    %187 = vmatmul.mubr.f32.gmra.mrb[0].mxu0 %v95
    %v188 = vpop.f32.mrb[0].mxu0
    %v189 = vadd.f32 %v82, %v188
    %v190 = vpop.f32.mrb[0].mxu0
    %v191 = vadd.f32 %v82, %v190
    %192 = vdwg.mxu0
    %v193 = vmax.f32 %v171, 0.0
    %v194 = vmax.f32 %v173, 0.0
    %v195 = vmax.f32 %v177, 0.0
    %v196 = vmax.f32 %v179, 0.0
    %v197 = vmax.f32 %v183, 0.0
    %v198 = vmax.f32 %v185, 0.0
    %v199 = vmax.f32 %v189, 0.0
    %v200 = vmax.f32 %v191, 0.0
    %v201 = vld [vmem:[%s6] sm:$0x1]
    %v202 = vld [vmem:[%s3] sm:$0xff]
    %v203 = vld [vmem:[%s3 + $0x8] sm:$0xff]
    %v204 = vld [vmem:[%s3 + $0x10] sm:$0xff]
    %v205 = vld [vmem:[%s3 + $0x18] sm:$0xff]
    %v206 = vld [vmem:[%s3 + $0x20] sm:$0xff]
    %v207 = vld [vmem:[%s3 + $0x28] sm:$0xff]
    %v208 = vld [vmem:[%s3 + $0x30] sm:$0xff]
    %v209 = vld [vmem:[%s3 + $0x38] sm:$0xff]
    %v210 = vld [vmem:[%s3 + $0x40] sm:$0xff]
    %v211 = vld [vmem:[%s3 + $0x48] sm:$0xff]
    %v212 = vld [vmem:[%s3 + $0x50] sm:$0xff]
    %v213 = vld [vmem:[%s3 + $0x58] sm:$0xff]
    %v214 = vld [vmem:[%s3 + $0x60] sm:$0xff]
    %v215 = vld [vmem:[%s3 + $0x68] sm:$0xff]
    %v216 = vld [vmem:[%s3 + $0x70] sm:$0xff]
    %v217 = vld [vmem:[%s3 + $0x78] sm:$0xff]
    %v218 = vmul.f32 %v202, %v193
    %v219 = vmul.f32 %v203, %v195
    %v220 = vmul.f32 %v204, %v197
    %v221 = vmul.f32 %v205, %v199
    %v222 = vmul.f32 %v206, %v193
    %v223 = vmul.f32 %v207, %v195
    %v224 = vmul.f32 %v208, %v197
    %v225 = vmul.f32 %v209, %v199
    %v226 = vmul.f32 %v210, %v193
    %v227 = vmul.f32 %v211, %v195
    %v228 = vmul.f32 %v212, %v197
    %v229 = vmul.f32 %v213, %v199
    %v230 = vmul.f32 %v214, %v193
    %v231 = vmul.f32 %v215, %v195
    %v232 = vmul.f32 %v216, %v197
    %v233 = vmul.f32 %v217, %v199
    %v234 = vsel %vm84, %v218, 0.0
    %v235 = vsel %vm84, %v219, 0.0
    %v236 = vadd.f32 %v234, %v235
    %v237 = vsel %vm84, %v220, 0.0
    %v238 = vadd.f32 %v236, %v237
    %v239 = vsel %vm84, %v221, 0.0
    %v240 = vadd.f32 %v238, %v239
    %v241 = vrot.slane %v240, 4
    %v242 = vadd.f32 %v240, %v241
    %v243 = vrot.slane %v242, 2
    %v244 = vadd.f32 %v242, %v243
    %v245 = vrot.slane %v244, 1
    %v246 = vadd.f32 %v244, %v245
    %v247 = vsel %vm84, %v222, 0.0
    %v248 = vsel %vm84, %v223, 0.0
    %v249 = vadd.f32 %v247, %v248
    %v250 = vsel %vm84, %v224, 0.0
    %v251 = vadd.f32 %v249, %v250
    %v252 = vsel %vm84, %v225, 0.0
    %v253 = vadd.f32 %v251, %v252
    %v254 = vrot.slane %v253, 4
    %v255 = vadd.f32 %v253, %v254
    %v256 = vrot.slane %v255, 2
    %v257 = vadd.f32 %v255, %v256
    %v258 = vrot.slane %v257, 1
    %v259 = vadd.f32 %v257, %v258
    %v260 = vsel %vm84, %v226, 0.0
    %v261 = vsel %vm84, %v227, 0.0
    %v262 = vadd.f32 %v260, %v261
    %v263 = vsel %vm84, %v228, 0.0
    %v264 = vadd.f32 %v262, %v263
    %v265 = vsel %vm84, %v229, 0.0
    %v266 = vadd.f32 %v264, %v265
    %v267 = vrot.slane %v266, 4
    %v268 = vadd.f32 %v266, %v267
    %v269 = vrot.slane %v268, 2
    %v270 = vadd.f32 %v268, %v269
    %v271 = vrot.slane %v270, 1
    %v272 = vadd.f32 %v270, %v271
    %v273 = vsel %vm84, %v230, 0.0
    %v274 = vsel %vm84, %v231, 0.0
    %v275 = vadd.f32 %v273, %v274
    %v276 = vsel %vm84, %v232, 0.0
    %v277 = vadd.f32 %v275, %v276
    %v278 = vsel %vm84, %v233, 0.0
    %v279 = vadd.f32 %v277, %v278
    %v280 = vrot.slane %v279, 4
    %v281 = vadd.f32 %v279, %v280
    %v282 = vrot.slane %v281, 2
    %v283 = vadd.f32 %v281, %v282
    %v284 = vrot.slane %v283, 1
    %v285 = vadd.f32 %v283, %v284
    %vm290 = vcmask 1041409
    %v291 = vsel %vm290, %v259, %v246
    %vm292 = vcmask 1042434
    %v293 = vsel %vm292, %v272, %v291
    %vm294 = vcmask 1043459
    %v295 = vsel %vm294, %v285, %v293
    %vm297 = vcmask 814080
    %v298 = vsel %vm297, %v295, 0.0
    %299 = vadd.xlane.f32.xlu0 %v298
    %v300 = vpop.xlane.xlu0 %299
    %v301 = vld [vmem:[%s4] sm:$0xf]
    %v302 = vadd.f32 %v300, %v301
    %v303 = vmax.f32 %v302, 0.0
    %v304 = vld [vmem:[%s5] sm:$0xf]
    %306 = vset.pattern.permute.xlu0 0
    %307 = vperm.xlu0 %306, %v303
    %v308 = vpop.permute.xlu0 %307
    %v310 = vmul.f32 %v304, %v308
    %vm311 = vcmask 125952
    %v312 = vsel %vm311, %v310, 0.0
    %v313 = vrot.slane %v312, 4
    %v314 = vadd.f32 %v312, %v313
    %v315 = vrot.slane %v314, 2
    %v316 = vadd.f32 %v314, %v315
    %v317 = vrot.slane %v316, 1
    %v318 = vadd.f32 %v316, %v317
    %v319 = vadd.f32 %v201, %v318
    %s320 = scalar_lea.vmem %s3, 128
    %v321 = vld [vmem:[%s320] sm:$0xff]
    %v322 = vld [vmem:[%s320 + $0x8] sm:$0xff]
    %v323 = vld [vmem:[%s320 + $0x10] sm:$0xff]
    %v324 = vld [vmem:[%s320 + $0x18] sm:$0xff]
    %v325 = vld [vmem:[%s320 + $0x20] sm:$0xff]
    %v326 = vld [vmem:[%s320 + $0x28] sm:$0xff]
    %v327 = vld [vmem:[%s320 + $0x30] sm:$0xff]
    %v328 = vld [vmem:[%s320 + $0x38] sm:$0xff]
    %v329 = vld [vmem:[%s320 + $0x40] sm:$0xff]
    %v330 = vld [vmem:[%s320 + $0x48] sm:$0xff]
    %v331 = vld [vmem:[%s320 + $0x50] sm:$0xff]
    %v332 = vld [vmem:[%s320 + $0x58] sm:$0xff]
    %v333 = vld [vmem:[%s320 + $0x60] sm:$0xff]
    %v334 = vld [vmem:[%s320 + $0x68] sm:$0xff]
    %v335 = vld [vmem:[%s320 + $0x70] sm:$0xff]
    %v336 = vld [vmem:[%s320 + $0x78] sm:$0xff]
    %v337 = vmul.f32 %v321, %v193
    %v338 = vmul.f32 %v322, %v195
    %v339 = vmul.f32 %v323, %v197
    %v340 = vmul.f32 %v324, %v199
    %v341 = vmul.f32 %v325, %v193
    %v342 = vmul.f32 %v326, %v195
    %v343 = vmul.f32 %v327, %v197
    %v344 = vmul.f32 %v328, %v199
    %v345 = vmul.f32 %v329, %v193
    %v346 = vmul.f32 %v330, %v195
    %v347 = vmul.f32 %v331, %v197
    %v348 = vmul.f32 %v332, %v199
    %v349 = vmul.f32 %v333, %v193
    %v350 = vmul.f32 %v334, %v195
    %v351 = vmul.f32 %v335, %v197
    %v352 = vmul.f32 %v336, %v199
    %v353 = vsel %vm84, %v337, 0.0
    %v354 = vsel %vm84, %v338, 0.0
    %v355 = vadd.f32 %v353, %v354
    %v356 = vsel %vm84, %v339, 0.0
    %v357 = vadd.f32 %v355, %v356
    %v358 = vsel %vm84, %v340, 0.0
    %v359 = vadd.f32 %v357, %v358
    %v360 = vrot.slane %v359, 4
    %v361 = vadd.f32 %v359, %v360
    %v362 = vrot.slane %v361, 2
    %v363 = vadd.f32 %v361, %v362
    %v364 = vrot.slane %v363, 1
    %v365 = vadd.f32 %v363, %v364
    %v366 = vsel %vm84, %v341, 0.0
    %v367 = vsel %vm84, %v342, 0.0
    %v368 = vadd.f32 %v366, %v367
    %v369 = vsel %vm84, %v343, 0.0
    %v370 = vadd.f32 %v368, %v369
    %v371 = vsel %vm84, %v344, 0.0
    %v372 = vadd.f32 %v370, %v371
    %v373 = vrot.slane %v372, 4
    %v374 = vadd.f32 %v372, %v373
    %v375 = vrot.slane %v374, 2
    %v376 = vadd.f32 %v374, %v375
    %v377 = vrot.slane %v376, 1
    %v378 = vadd.f32 %v376, %v377
    %v379 = vsel %vm84, %v345, 0.0
    %v380 = vsel %vm84, %v346, 0.0
    %v381 = vadd.f32 %v379, %v380
    %v382 = vsel %vm84, %v347, 0.0
    %v383 = vadd.f32 %v381, %v382
    %v384 = vsel %vm84, %v348, 0.0
    %v385 = vadd.f32 %v383, %v384
    %v386 = vrot.slane %v385, 4
    %v387 = vadd.f32 %v385, %v386
    %v388 = vrot.slane %v387, 2
    %v389 = vadd.f32 %v387, %v388
    %v390 = vrot.slane %v389, 1
    %v391 = vadd.f32 %v389, %v390
    %v392 = vsel %vm84, %v349, 0.0
    %v393 = vsel %vm84, %v350, 0.0
    %v394 = vadd.f32 %v392, %v393
    %v395 = vsel %vm84, %v351, 0.0
    %v396 = vadd.f32 %v394, %v395
    %v397 = vsel %vm84, %v352, 0.0
    %v398 = vadd.f32 %v396, %v397
    %v399 = vrot.slane %v398, 4
    %v400 = vadd.f32 %v398, %v399
    %v401 = vrot.slane %v400, 2
    %v402 = vadd.f32 %v400, %v401
    %v403 = vrot.slane %v402, 1
    %v404 = vadd.f32 %v402, %v403
    %v409 = vsel %vm290, %v378, %v365
    %v410 = vsel %vm292, %v391, %v409
    %v411 = vsel %vm294, %v404, %v410
    %v413 = vsel %vm297, %v411, 0.0
    %414 = vadd.xlane.f32.xlu0 %v413
    %v415 = vpop.xlane.xlu0 %414
    %v416 = vld [vmem:[%s4 + $0x4] sm:$0xf]
    %v417 = vadd.f32 %v415, %v416
    %v418 = vmax.f32 %v417, 0.0
    %v419 = vld [vmem:[%s5 + $0x4] sm:$0xf]
    %421 = vset.pattern.permute.xlu0 0
    %422 = vperm.xlu0 %421, %v418
    %v423 = vpop.permute.xlu0 %422
    %v425 = vmul.f32 %v419, %v423
    %v426 = vsel %vm311, %v425, 0.0
    %v427 = vrot.slane %v426, 4
    %v428 = vadd.f32 %v426, %v427
    %v429 = vrot.slane %v428, 2
    %v430 = vadd.f32 %v428, %v429
    %v431 = vrot.slane %v430, 1
    %v432 = vadd.f32 %v430, %v431
    %v433 = vadd.f32 %v319, %v432
    %s434 = scalar_lea.vmem %s3, 256
    %v435 = vld [vmem:[%s434] sm:$0xff]
    %v436 = vld [vmem:[%s434 + $0x8] sm:$0xff]
    %v437 = vld [vmem:[%s434 + $0x10] sm:$0xff]
    %v438 = vld [vmem:[%s434 + $0x18] sm:$0xff]
    %v439 = vld [vmem:[%s434 + $0x20] sm:$0xff]
    %v440 = vld [vmem:[%s434 + $0x28] sm:$0xff]
    %v441 = vld [vmem:[%s434 + $0x30] sm:$0xff]
    %v442 = vld [vmem:[%s434 + $0x38] sm:$0xff]
    %v443 = vld [vmem:[%s434 + $0x40] sm:$0xff]
    %v444 = vld [vmem:[%s434 + $0x48] sm:$0xff]
    %v445 = vld [vmem:[%s434 + $0x50] sm:$0xff]
    %v446 = vld [vmem:[%s434 + $0x58] sm:$0xff]
    %v447 = vld [vmem:[%s434 + $0x60] sm:$0xff]
    %v448 = vld [vmem:[%s434 + $0x68] sm:$0xff]
    %v449 = vld [vmem:[%s434 + $0x70] sm:$0xff]
    %v450 = vld [vmem:[%s434 + $0x78] sm:$0xff]
    %v451 = vmul.f32 %v435, %v193
    %v452 = vmul.f32 %v436, %v195
    %v453 = vmul.f32 %v437, %v197
    %v454 = vmul.f32 %v438, %v199
    %v455 = vmul.f32 %v439, %v193
    %v456 = vmul.f32 %v440, %v195
    %v457 = vmul.f32 %v441, %v197
    %v458 = vmul.f32 %v442, %v199
    %v459 = vmul.f32 %v443, %v193
    %v460 = vmul.f32 %v444, %v195
    %v461 = vmul.f32 %v445, %v197
    %v462 = vmul.f32 %v446, %v199
    %v463 = vmul.f32 %v447, %v193
    %v464 = vmul.f32 %v448, %v195
    %v465 = vmul.f32 %v449, %v197
    %v466 = vmul.f32 %v450, %v199
    %v467 = vsel %vm84, %v451, 0.0
    %v468 = vsel %vm84, %v452, 0.0
    %v469 = vadd.f32 %v467, %v468
    %v470 = vsel %vm84, %v453, 0.0
    %v471 = vadd.f32 %v469, %v470
    %v472 = vsel %vm84, %v454, 0.0
    %v473 = vadd.f32 %v471, %v472
    %v474 = vrot.slane %v473, 4
    %v475 = vadd.f32 %v473, %v474
    %v476 = vrot.slane %v475, 2
    %v477 = vadd.f32 %v475, %v476
    %v478 = vrot.slane %v477, 1
    %v479 = vadd.f32 %v477, %v478
    %v480 = vsel %vm84, %v455, 0.0
    %v481 = vsel %vm84, %v456, 0.0
    %v482 = vadd.f32 %v480, %v481
    %v483 = vsel %vm84, %v457, 0.0
    %v484 = vadd.f32 %v482, %v483
    %v485 = vsel %vm84, %v458, 0.0
    %v486 = vadd.f32 %v484, %v485
    %v487 = vrot.slane %v486, 4
    %v488 = vadd.f32 %v486, %v487
    %v489 = vrot.slane %v488, 2
    %v490 = vadd.f32 %v488, %v489
    %v491 = vrot.slane %v490, 1
    %v492 = vadd.f32 %v490, %v491
    %v493 = vsel %vm84, %v459, 0.0
    %v494 = vsel %vm84, %v460, 0.0
    %v495 = vadd.f32 %v493, %v494
    %v496 = vsel %vm84, %v461, 0.0
    %v497 = vadd.f32 %v495, %v496
    %v498 = vsel %vm84, %v462, 0.0
    %v499 = vadd.f32 %v497, %v498
    %v500 = vrot.slane %v499, 4
    %v501 = vadd.f32 %v499, %v500
    %v502 = vrot.slane %v501, 2
    %v503 = vadd.f32 %v501, %v502
    %v504 = vrot.slane %v503, 1
    %v505 = vadd.f32 %v503, %v504
    %v506 = vsel %vm84, %v463, 0.0
    %v507 = vsel %vm84, %v464, 0.0
    %v508 = vadd.f32 %v506, %v507
    %v509 = vsel %vm84, %v465, 0.0
    %v510 = vadd.f32 %v508, %v509
    %v511 = vsel %vm84, %v466, 0.0
    %v512 = vadd.f32 %v510, %v511
    %v513 = vrot.slane %v512, 4
    %v514 = vadd.f32 %v512, %v513
    %v515 = vrot.slane %v514, 2
    %v516 = vadd.f32 %v514, %v515
    %v517 = vrot.slane %v516, 1
    %v518 = vadd.f32 %v516, %v517
    %v523 = vsel %vm290, %v492, %v479
    %v524 = vsel %vm292, %v505, %v523
    %v525 = vsel %vm294, %v518, %v524
    %v527 = vsel %vm297, %v525, 0.0
    %528 = vadd.xlane.f32.xlu0 %v527
    %v529 = vpop.xlane.xlu0 %528
    %v530 = vld [vmem:[%s4 + $0x8] sm:$0xf]
    %v531 = vadd.f32 %v529, %v530
    %v532 = vmax.f32 %v531, 0.0
    %v533 = vld [vmem:[%s5 + $0x8] sm:$0xf]
    %535 = vset.pattern.permute.xlu0 0
    %536 = vperm.xlu0 %535, %v532
    %v537 = vpop.permute.xlu0 %536
    %v539 = vmul.f32 %v533, %v537
    %v540 = vsel %vm311, %v539, 0.0
    %v541 = vrot.slane %v540, 4
    %v542 = vadd.f32 %v540, %v541
    %v543 = vrot.slane %v542, 2
    %v544 = vadd.f32 %v542, %v543
    %v545 = vrot.slane %v544, 1
    %v546 = vadd.f32 %v544, %v545
    %v547 = vadd.f32 %v433, %v546
    %s548 = scalar_lea.vmem %s3, 384
    %v549 = vld [vmem:[%s548] sm:$0xff]
    %v550 = vld [vmem:[%s548 + $0x8] sm:$0xff]
    %v551 = vld [vmem:[%s548 + $0x10] sm:$0xff]
    %v552 = vld [vmem:[%s548 + $0x18] sm:$0xff]
    %v553 = vld [vmem:[%s548 + $0x20] sm:$0xff]
    %v554 = vld [vmem:[%s548 + $0x28] sm:$0xff]
    %v555 = vld [vmem:[%s548 + $0x30] sm:$0xff]
    %v556 = vld [vmem:[%s548 + $0x38] sm:$0xff]
    %v557 = vld [vmem:[%s548 + $0x40] sm:$0xff]
    %v558 = vld [vmem:[%s548 + $0x48] sm:$0xff]
    %v559 = vld [vmem:[%s548 + $0x50] sm:$0xff]
    %v560 = vld [vmem:[%s548 + $0x58] sm:$0xff]
    %v561 = vld [vmem:[%s548 + $0x60] sm:$0xff]
    %v562 = vld [vmem:[%s548 + $0x68] sm:$0xff]
    %v563 = vld [vmem:[%s548 + $0x70] sm:$0xff]
    %v564 = vld [vmem:[%s548 + $0x78] sm:$0xff]
    %v565 = vmul.f32 %v549, %v193
    %v566 = vmul.f32 %v550, %v195
    %v567 = vmul.f32 %v551, %v197
    %v568 = vmul.f32 %v552, %v199
    %v569 = vmul.f32 %v553, %v193
    %v570 = vmul.f32 %v554, %v195
    %v571 = vmul.f32 %v555, %v197
    %v572 = vmul.f32 %v556, %v199
    %v573 = vmul.f32 %v557, %v193
    %v574 = vmul.f32 %v558, %v195
    %v575 = vmul.f32 %v559, %v197
    %v576 = vmul.f32 %v560, %v199
    %v577 = vmul.f32 %v561, %v193
    %v578 = vmul.f32 %v562, %v195
    %v579 = vmul.f32 %v563, %v197
    %v580 = vmul.f32 %v564, %v199
    %v581 = vsel %vm84, %v565, 0.0
    %v582 = vsel %vm84, %v566, 0.0
    %v583 = vadd.f32 %v581, %v582
    %v584 = vsel %vm84, %v567, 0.0
    %v585 = vadd.f32 %v583, %v584
    %v586 = vsel %vm84, %v568, 0.0
    %v587 = vadd.f32 %v585, %v586
    %v588 = vrot.slane %v587, 4
    %v589 = vadd.f32 %v587, %v588
    %v590 = vrot.slane %v589, 2
    %v591 = vadd.f32 %v589, %v590
    %v592 = vrot.slane %v591, 1
    %v593 = vadd.f32 %v591, %v592
    %v594 = vsel %vm84, %v569, 0.0
    %v595 = vsel %vm84, %v570, 0.0
    %v596 = vadd.f32 %v594, %v595
    %v597 = vsel %vm84, %v571, 0.0
    %v598 = vadd.f32 %v596, %v597
    %v599 = vsel %vm84, %v572, 0.0
    %v600 = vadd.f32 %v598, %v599
    %v601 = vrot.slane %v600, 4
    %v602 = vadd.f32 %v600, %v601
    %v603 = vrot.slane %v602, 2
    %v604 = vadd.f32 %v602, %v603
    %v605 = vrot.slane %v604, 1
    %v606 = vadd.f32 %v604, %v605
    %v607 = vsel %vm84, %v573, 0.0
    %v608 = vsel %vm84, %v574, 0.0
    %v609 = vadd.f32 %v607, %v608
    %v610 = vsel %vm84, %v575, 0.0
    %v611 = vadd.f32 %v609, %v610
    %v612 = vsel %vm84, %v576, 0.0
    %v613 = vadd.f32 %v611, %v612
    %v614 = vrot.slane %v613, 4
    %v615 = vadd.f32 %v613, %v614
    %v616 = vrot.slane %v615, 2
    %v617 = vadd.f32 %v615, %v616
    %v618 = vrot.slane %v617, 1
    %v619 = vadd.f32 %v617, %v618
    %v620 = vsel %vm84, %v577, 0.0
    %v621 = vsel %vm84, %v578, 0.0
    %v622 = vadd.f32 %v620, %v621
    %v623 = vsel %vm84, %v579, 0.0
    %v624 = vadd.f32 %v622, %v623
    %v625 = vsel %vm84, %v580, 0.0
    %v626 = vadd.f32 %v624, %v625
    %v627 = vrot.slane %v626, 4
    %v628 = vadd.f32 %v626, %v627
    %v629 = vrot.slane %v628, 2
    %v630 = vadd.f32 %v628, %v629
    %v631 = vrot.slane %v630, 1
    %v632 = vadd.f32 %v630, %v631
    %v637 = vsel %vm290, %v606, %v593
    %v638 = vsel %vm292, %v619, %v637
    %v639 = vsel %vm294, %v632, %v638
    %v641 = vsel %vm297, %v639, 0.0
    %642 = vadd.xlane.f32.xlu0 %v641
    %v643 = vpop.xlane.xlu0 %642
    %v644 = vld [vmem:[%s4 + $0xc] sm:$0xf]
    %v645 = vadd.f32 %v643, %v644
    %v646 = vmax.f32 %v645, 0.0
    %v647 = vld [vmem:[%s5 + $0xc] sm:$0xf]
    %649 = vset.pattern.permute.xlu0 0
    %650 = vperm.xlu0 %649, %v646
    %v651 = vpop.permute.xlu0 %650
    %v653 = vmul.f32 %v647, %v651
    %v654 = vsel %vm311, %v653, 0.0
    %v655 = vrot.slane %v654, 4
    %v656 = vadd.f32 %v654, %v655
    %v657 = vrot.slane %v656, 2
    %v658 = vadd.f32 %v656, %v657
    %v659 = vrot.slane %v658, 1
    %v660 = vadd.f32 %v658, %v659
    %v661 = vadd.f32 %v547, %v660
    %s662 = scalar_lea.vmem %s3, 512
    %v663 = vld [vmem:[%s662] sm:$0xff]
    %v664 = vld [vmem:[%s662 + $0x8] sm:$0xff]
    %v665 = vld [vmem:[%s662 + $0x10] sm:$0xff]
    %v666 = vld [vmem:[%s662 + $0x18] sm:$0xff]
    %v667 = vld [vmem:[%s662 + $0x20] sm:$0xff]
    %v668 = vld [vmem:[%s662 + $0x28] sm:$0xff]
    %v669 = vld [vmem:[%s662 + $0x30] sm:$0xff]
    %v670 = vld [vmem:[%s662 + $0x38] sm:$0xff]
    %v671 = vld [vmem:[%s662 + $0x40] sm:$0xff]
    %v672 = vld [vmem:[%s662 + $0x48] sm:$0xff]
    %v673 = vld [vmem:[%s662 + $0x50] sm:$0xff]
    %v674 = vld [vmem:[%s662 + $0x58] sm:$0xff]
    %v675 = vld [vmem:[%s662 + $0x60] sm:$0xff]
    %v676 = vld [vmem:[%s662 + $0x68] sm:$0xff]
    %v677 = vld [vmem:[%s662 + $0x70] sm:$0xff]
    %v678 = vld [vmem:[%s662 + $0x78] sm:$0xff]
    %v679 = vmul.f32 %v663, %v193
    %v680 = vmul.f32 %v664, %v195
    %v681 = vmul.f32 %v665, %v197
    %v682 = vmul.f32 %v666, %v199
    %v683 = vmul.f32 %v667, %v193
    %v684 = vmul.f32 %v668, %v195
    %v685 = vmul.f32 %v669, %v197
    %v686 = vmul.f32 %v670, %v199
    %v687 = vmul.f32 %v671, %v193
    %v688 = vmul.f32 %v672, %v195
    %v689 = vmul.f32 %v673, %v197
    %v690 = vmul.f32 %v674, %v199
    %v691 = vmul.f32 %v675, %v193
    %v692 = vmul.f32 %v676, %v195
    %v693 = vmul.f32 %v677, %v197
    %v694 = vmul.f32 %v678, %v199
    %v695 = vsel %vm84, %v679, 0.0
    %v696 = vsel %vm84, %v680, 0.0
    %v697 = vadd.f32 %v695, %v696
    %v698 = vsel %vm84, %v681, 0.0
    %v699 = vadd.f32 %v697, %v698
    %v700 = vsel %vm84, %v682, 0.0
    %v701 = vadd.f32 %v699, %v700
    %v702 = vrot.slane %v701, 4
    %v703 = vadd.f32 %v701, %v702
    %v704 = vrot.slane %v703, 2
    %v705 = vadd.f32 %v703, %v704
    %v706 = vrot.slane %v705, 1
    %v707 = vadd.f32 %v705, %v706
    %v708 = vsel %vm84, %v683, 0.0
    %v709 = vsel %vm84, %v684, 0.0
    %v710 = vadd.f32 %v708, %v709
    %v711 = vsel %vm84, %v685, 0.0
    %v712 = vadd.f32 %v710, %v711
    %v713 = vsel %vm84, %v686, 0.0
    %v714 = vadd.f32 %v712, %v713
    %v715 = vrot.slane %v714, 4
    %v716 = vadd.f32 %v714, %v715
    %v717 = vrot.slane %v716, 2
    %v718 = vadd.f32 %v716, %v717
    %v719 = vrot.slane %v718, 1
    %v720 = vadd.f32 %v718, %v719
    %v721 = vsel %vm84, %v687, 0.0
    %v722 = vsel %vm84, %v688, 0.0
    %v723 = vadd.f32 %v721, %v722
    %v724 = vsel %vm84, %v689, 0.0
    %v725 = vadd.f32 %v723, %v724
    %v726 = vsel %vm84, %v690, 0.0
    %v727 = vadd.f32 %v725, %v726
    %v728 = vrot.slane %v727, 4
    %v729 = vadd.f32 %v727, %v728
    %v730 = vrot.slane %v729, 2
    %v731 = vadd.f32 %v729, %v730
    %v732 = vrot.slane %v731, 1
    %v733 = vadd.f32 %v731, %v732
    %v734 = vsel %vm84, %v691, 0.0
    %v735 = vsel %vm84, %v692, 0.0
    %v736 = vadd.f32 %v734, %v735
    %v737 = vsel %vm84, %v693, 0.0
    %v738 = vadd.f32 %v736, %v737
    %v739 = vsel %vm84, %v694, 0.0
    %v740 = vadd.f32 %v738, %v739
    %v741 = vrot.slane %v740, 4
    %v742 = vadd.f32 %v740, %v741
    %v743 = vrot.slane %v742, 2
    %v744 = vadd.f32 %v742, %v743
    %v745 = vrot.slane %v744, 1
    %v746 = vadd.f32 %v744, %v745
    %v751 = vsel %vm290, %v720, %v707
    %v752 = vsel %vm292, %v733, %v751
    %v753 = vsel %vm294, %v746, %v752
    %v755 = vsel %vm297, %v753, 0.0
    %756 = vadd.xlane.f32.xlu0 %v755
    %v757 = vpop.xlane.xlu0 %756
    %v758 = vld [vmem:[%s4 + $0x10] sm:$0xf]
    %v759 = vadd.f32 %v757, %v758
    %v760 = vmax.f32 %v759, 0.0
    %v761 = vld [vmem:[%s5 + $0x10] sm:$0xf]
    %763 = vset.pattern.permute.xlu0 0
    %764 = vperm.xlu0 %763, %v760
    %v765 = vpop.permute.xlu0 %764
    %v767 = vmul.f32 %v761, %v765
    %v768 = vsel %vm311, %v767, 0.0
    %v769 = vrot.slane %v768, 4
    %v770 = vadd.f32 %v768, %v769
    %v771 = vrot.slane %v770, 2
    %v772 = vadd.f32 %v770, %v771
    %v773 = vrot.slane %v772, 1
    %v774 = vadd.f32 %v772, %v773
    %v775 = vadd.f32 %v661, %v774
    %s776 = scalar_lea.vmem %s3, 640
    %v777 = vld [vmem:[%s776] sm:$0xff]
    %v778 = vld [vmem:[%s776 + $0x8] sm:$0xff]
    %v779 = vld [vmem:[%s776 + $0x10] sm:$0xff]
    %v780 = vld [vmem:[%s776 + $0x18] sm:$0xff]
    %v781 = vld [vmem:[%s776 + $0x20] sm:$0xff]
    %v782 = vld [vmem:[%s776 + $0x28] sm:$0xff]
    %v783 = vld [vmem:[%s776 + $0x30] sm:$0xff]
    %v784 = vld [vmem:[%s776 + $0x38] sm:$0xff]
    %v785 = vld [vmem:[%s776 + $0x40] sm:$0xff]
    %v786 = vld [vmem:[%s776 + $0x48] sm:$0xff]
    %v787 = vld [vmem:[%s776 + $0x50] sm:$0xff]
    %v788 = vld [vmem:[%s776 + $0x58] sm:$0xff]
    %v789 = vld [vmem:[%s776 + $0x60] sm:$0xff]
    %v790 = vld [vmem:[%s776 + $0x68] sm:$0xff]
    %v791 = vld [vmem:[%s776 + $0x70] sm:$0xff]
    %v792 = vld [vmem:[%s776 + $0x78] sm:$0xff]
    %v793 = vmul.f32 %v777, %v193
    %v794 = vmul.f32 %v778, %v195
    %v795 = vmul.f32 %v779, %v197
    %v796 = vmul.f32 %v780, %v199
    %v797 = vmul.f32 %v781, %v193
    %v798 = vmul.f32 %v782, %v195
    %v799 = vmul.f32 %v783, %v197
    %v800 = vmul.f32 %v784, %v199
    %v801 = vmul.f32 %v785, %v193
    %v802 = vmul.f32 %v786, %v195
    %v803 = vmul.f32 %v787, %v197
    %v804 = vmul.f32 %v788, %v199
    %v805 = vmul.f32 %v789, %v193
    %v806 = vmul.f32 %v790, %v195
    %v807 = vmul.f32 %v791, %v197
    %v808 = vmul.f32 %v792, %v199
    %v809 = vsel %vm84, %v793, 0.0
    %v810 = vsel %vm84, %v794, 0.0
    %v811 = vadd.f32 %v809, %v810
    %v812 = vsel %vm84, %v795, 0.0
    %v813 = vadd.f32 %v811, %v812
    %v814 = vsel %vm84, %v796, 0.0
    %v815 = vadd.f32 %v813, %v814
    %v816 = vrot.slane %v815, 4
    %v817 = vadd.f32 %v815, %v816
    %v818 = vrot.slane %v817, 2
    %v819 = vadd.f32 %v817, %v818
    %v820 = vrot.slane %v819, 1
    %v821 = vadd.f32 %v819, %v820
    %v822 = vsel %vm84, %v797, 0.0
    %v823 = vsel %vm84, %v798, 0.0
    %v824 = vadd.f32 %v822, %v823
    %v825 = vsel %vm84, %v799, 0.0
    %v826 = vadd.f32 %v824, %v825
    %v827 = vsel %vm84, %v800, 0.0
    %v828 = vadd.f32 %v826, %v827
    %v829 = vrot.slane %v828, 4
    %v830 = vadd.f32 %v828, %v829
    %v831 = vrot.slane %v830, 2
    %v832 = vadd.f32 %v830, %v831
    %v833 = vrot.slane %v832, 1
    %v834 = vadd.f32 %v832, %v833
    %v835 = vsel %vm84, %v801, 0.0
    %v836 = vsel %vm84, %v802, 0.0
    %v837 = vadd.f32 %v835, %v836
    %v838 = vsel %vm84, %v803, 0.0
    %v839 = vadd.f32 %v837, %v838
    %v840 = vsel %vm84, %v804, 0.0
    %v841 = vadd.f32 %v839, %v840
    %v842 = vrot.slane %v841, 4
    %v843 = vadd.f32 %v841, %v842
    %v844 = vrot.slane %v843, 2
    %v845 = vadd.f32 %v843, %v844
    %v846 = vrot.slane %v845, 1
    %v847 = vadd.f32 %v845, %v846
    %v848 = vsel %vm84, %v805, 0.0
    %v849 = vsel %vm84, %v806, 0.0
    %v850 = vadd.f32 %v848, %v849
    %v851 = vsel %vm84, %v807, 0.0
    %v852 = vadd.f32 %v850, %v851
    %v853 = vsel %vm84, %v808, 0.0
    %v854 = vadd.f32 %v852, %v853
    %v855 = vrot.slane %v854, 4
    %v856 = vadd.f32 %v854, %v855
    %v857 = vrot.slane %v856, 2
    %v858 = vadd.f32 %v856, %v857
    %v859 = vrot.slane %v858, 1
    %v860 = vadd.f32 %v858, %v859
    %v865 = vsel %vm290, %v834, %v821
    %v866 = vsel %vm292, %v847, %v865
    %v867 = vsel %vm294, %v860, %v866
    %v869 = vsel %vm297, %v867, 0.0
    %870 = vadd.xlane.f32.xlu0 %v869
    %v871 = vpop.xlane.xlu0 %870
    %v872 = vld [vmem:[%s4 + $0x14] sm:$0xf]
    %v873 = vadd.f32 %v871, %v872
    %v874 = vmax.f32 %v873, 0.0
    %v875 = vld [vmem:[%s5 + $0x14] sm:$0xf]
    %877 = vset.pattern.permute.xlu0 0
    %878 = vperm.xlu0 %877, %v874
    %v879 = vpop.permute.xlu0 %878
    %v881 = vmul.f32 %v875, %v879
    %v882 = vsel %vm311, %v881, 0.0
    %v883 = vrot.slane %v882, 4
    %v884 = vadd.f32 %v882, %v883
    %v885 = vrot.slane %v884, 2
    %v886 = vadd.f32 %v884, %v885
    %v887 = vrot.slane %v886, 1
    %v888 = vadd.f32 %v886, %v887
    %v889 = vadd.f32 %v775, %v888
    %s890 = scalar_lea.vmem %s3, 768
    %v891 = vld [vmem:[%s890] sm:$0xff]
    %v892 = vld [vmem:[%s890 + $0x8] sm:$0xff]
    %v893 = vld [vmem:[%s890 + $0x10] sm:$0xff]
    %v894 = vld [vmem:[%s890 + $0x18] sm:$0xff]
    %v895 = vld [vmem:[%s890 + $0x20] sm:$0xff]
    %v896 = vld [vmem:[%s890 + $0x28] sm:$0xff]
    %v897 = vld [vmem:[%s890 + $0x30] sm:$0xff]
    %v898 = vld [vmem:[%s890 + $0x38] sm:$0xff]
    %v899 = vld [vmem:[%s890 + $0x40] sm:$0xff]
    %v900 = vld [vmem:[%s890 + $0x48] sm:$0xff]
    %v901 = vld [vmem:[%s890 + $0x50] sm:$0xff]
    %v902 = vld [vmem:[%s890 + $0x58] sm:$0xff]
    %v903 = vld [vmem:[%s890 + $0x60] sm:$0xff]
    %v904 = vld [vmem:[%s890 + $0x68] sm:$0xff]
    %v905 = vld [vmem:[%s890 + $0x70] sm:$0xff]
    %v906 = vld [vmem:[%s890 + $0x78] sm:$0xff]
    %v907 = vmul.f32 %v891, %v193
    %v908 = vmul.f32 %v892, %v195
    %v909 = vmul.f32 %v893, %v197
    %v910 = vmul.f32 %v894, %v199
    %v911 = vmul.f32 %v895, %v193
    %v912 = vmul.f32 %v896, %v195
    %v913 = vmul.f32 %v897, %v197
    %v914 = vmul.f32 %v898, %v199
    %v915 = vmul.f32 %v899, %v193
    %v916 = vmul.f32 %v900, %v195
    %v917 = vmul.f32 %v901, %v197
    %v918 = vmul.f32 %v902, %v199
    %v919 = vmul.f32 %v903, %v193
    %v920 = vmul.f32 %v904, %v195
    %v921 = vmul.f32 %v905, %v197
    %v922 = vmul.f32 %v906, %v199
    %v923 = vsel %vm84, %v907, 0.0
    %v924 = vsel %vm84, %v908, 0.0
    %v925 = vadd.f32 %v923, %v924
    %v926 = vsel %vm84, %v909, 0.0
    %v927 = vadd.f32 %v925, %v926
    %v928 = vsel %vm84, %v910, 0.0
    %v929 = vadd.f32 %v927, %v928
    %v930 = vrot.slane %v929, 4
    %v931 = vadd.f32 %v929, %v930
    %v932 = vrot.slane %v931, 2
    %v933 = vadd.f32 %v931, %v932
    %v934 = vrot.slane %v933, 1
    %v935 = vadd.f32 %v933, %v934
    %v936 = vsel %vm84, %v911, 0.0
    %v937 = vsel %vm84, %v912, 0.0
    %v938 = vadd.f32 %v936, %v937
    %v939 = vsel %vm84, %v913, 0.0
    %v940 = vadd.f32 %v938, %v939
    %v941 = vsel %vm84, %v914, 0.0
    %v942 = vadd.f32 %v940, %v941
    %v943 = vrot.slane %v942, 4
    %v944 = vadd.f32 %v942, %v943
    %v945 = vrot.slane %v944, 2
    %v946 = vadd.f32 %v944, %v945
    %v947 = vrot.slane %v946, 1
    %v948 = vadd.f32 %v946, %v947
    %v949 = vsel %vm84, %v915, 0.0
    %v950 = vsel %vm84, %v916, 0.0
    %v951 = vadd.f32 %v949, %v950
    %v952 = vsel %vm84, %v917, 0.0
    %v953 = vadd.f32 %v951, %v952
    %v954 = vsel %vm84, %v918, 0.0
    %v955 = vadd.f32 %v953, %v954
    %v956 = vrot.slane %v955, 4
    %v957 = vadd.f32 %v955, %v956
    %v958 = vrot.slane %v957, 2
    %v959 = vadd.f32 %v957, %v958
    %v960 = vrot.slane %v959, 1
    %v961 = vadd.f32 %v959, %v960
    %v962 = vsel %vm84, %v919, 0.0
    %v963 = vsel %vm84, %v920, 0.0
    %v964 = vadd.f32 %v962, %v963
    %v965 = vsel %vm84, %v921, 0.0
    %v966 = vadd.f32 %v964, %v965
    %v967 = vsel %vm84, %v922, 0.0
    %v968 = vadd.f32 %v966, %v967
    %v969 = vrot.slane %v968, 4
    %v970 = vadd.f32 %v968, %v969
    %v971 = vrot.slane %v970, 2
    %v972 = vadd.f32 %v970, %v971
    %v973 = vrot.slane %v972, 1
    %v974 = vadd.f32 %v972, %v973
    %v979 = vsel %vm290, %v948, %v935
    %v980 = vsel %vm292, %v961, %v979
    %v981 = vsel %vm294, %v974, %v980
    %v983 = vsel %vm297, %v981, 0.0
    %984 = vadd.xlane.f32.xlu0 %v983
    %v985 = vpop.xlane.xlu0 %984
    %v986 = vld [vmem:[%s4 + $0x18] sm:$0xf]
    %v987 = vadd.f32 %v985, %v986
    %v988 = vmax.f32 %v987, 0.0
    %v989 = vld [vmem:[%s5 + $0x18] sm:$0xf]
    %991 = vset.pattern.permute.xlu0 0
    %992 = vperm.xlu0 %991, %v988
    %v993 = vpop.permute.xlu0 %992
    %v995 = vmul.f32 %v989, %v993
    %v996 = vsel %vm311, %v995, 0.0
    %v997 = vrot.slane %v996, 4
    %v998 = vadd.f32 %v996, %v997
    %v999 = vrot.slane %v998, 2
    %v1000 = vadd.f32 %v998, %v999
    %v1001 = vrot.slane %v1000, 1
    %v1002 = vadd.f32 %v1000, %v1001
    %v1003 = vadd.f32 %v889, %v1002
    %s1004 = scalar_lea.vmem %s3, 896
    %v1005 = vld [vmem:[%s1004] sm:$0xff]
    %v1006 = vld [vmem:[%s1004 + $0x8] sm:$0xff]
    %v1007 = vld [vmem:[%s1004 + $0x10] sm:$0xff]
    %v1008 = vld [vmem:[%s1004 + $0x18] sm:$0xff]
    %v1009 = vld [vmem:[%s1004 + $0x20] sm:$0xff]
    %v1010 = vld [vmem:[%s1004 + $0x28] sm:$0xff]
    %v1011 = vld [vmem:[%s1004 + $0x30] sm:$0xff]
    %v1012 = vld [vmem:[%s1004 + $0x38] sm:$0xff]
    %v1013 = vld [vmem:[%s1004 + $0x40] sm:$0xff]
    %v1014 = vld [vmem:[%s1004 + $0x48] sm:$0xff]
    %v1015 = vld [vmem:[%s1004 + $0x50] sm:$0xff]
    %v1016 = vld [vmem:[%s1004 + $0x58] sm:$0xff]
    %v1017 = vld [vmem:[%s1004 + $0x60] sm:$0xff]
    %v1018 = vld [vmem:[%s1004 + $0x68] sm:$0xff]
    %v1019 = vld [vmem:[%s1004 + $0x70] sm:$0xff]
    %v1020 = vld [vmem:[%s1004 + $0x78] sm:$0xff]
    %v1021 = vmul.f32 %v1005, %v193
    %v1022 = vmul.f32 %v1006, %v195
    %v1023 = vmul.f32 %v1007, %v197
    %v1024 = vmul.f32 %v1008, %v199
    %v1025 = vmul.f32 %v1009, %v193
    %v1026 = vmul.f32 %v1010, %v195
    %v1027 = vmul.f32 %v1011, %v197
    %v1028 = vmul.f32 %v1012, %v199
    %v1029 = vmul.f32 %v1013, %v193
    %v1030 = vmul.f32 %v1014, %v195
    %v1031 = vmul.f32 %v1015, %v197
    %v1032 = vmul.f32 %v1016, %v199
    %v1033 = vmul.f32 %v1017, %v193
    %v1034 = vmul.f32 %v1018, %v195
    %v1035 = vmul.f32 %v1019, %v197
    %v1036 = vmul.f32 %v1020, %v199
    %v1037 = vsel %vm84, %v1021, 0.0
    %v1038 = vsel %vm84, %v1022, 0.0
    %v1039 = vadd.f32 %v1037, %v1038
    %v1040 = vsel %vm84, %v1023, 0.0
    %v1041 = vadd.f32 %v1039, %v1040
    %v1042 = vsel %vm84, %v1024, 0.0
    %v1043 = vadd.f32 %v1041, %v1042
    %v1044 = vrot.slane %v1043, 4
    %v1045 = vadd.f32 %v1043, %v1044
    %v1046 = vrot.slane %v1045, 2
    %v1047 = vadd.f32 %v1045, %v1046
    %v1048 = vrot.slane %v1047, 1
    %v1049 = vadd.f32 %v1047, %v1048
    %v1050 = vsel %vm84, %v1025, 0.0
    %v1051 = vsel %vm84, %v1026, 0.0
    %v1052 = vadd.f32 %v1050, %v1051
    %v1053 = vsel %vm84, %v1027, 0.0
    %v1054 = vadd.f32 %v1052, %v1053
    %v1055 = vsel %vm84, %v1028, 0.0
    %v1056 = vadd.f32 %v1054, %v1055
    %v1057 = vrot.slane %v1056, 4
    %v1058 = vadd.f32 %v1056, %v1057
    %v1059 = vrot.slane %v1058, 2
    %v1060 = vadd.f32 %v1058, %v1059
    %v1061 = vrot.slane %v1060, 1
    %v1062 = vadd.f32 %v1060, %v1061
    %v1063 = vsel %vm84, %v1029, 0.0
    %v1064 = vsel %vm84, %v1030, 0.0
    %v1065 = vadd.f32 %v1063, %v1064
    %v1066 = vsel %vm84, %v1031, 0.0
    %v1067 = vadd.f32 %v1065, %v1066
    %v1068 = vsel %vm84, %v1032, 0.0
    %v1069 = vadd.f32 %v1067, %v1068
    %v1070 = vrot.slane %v1069, 4
    %v1071 = vadd.f32 %v1069, %v1070
    %v1072 = vrot.slane %v1071, 2
    %v1073 = vadd.f32 %v1071, %v1072
    %v1074 = vrot.slane %v1073, 1
    %v1075 = vadd.f32 %v1073, %v1074
    %v1076 = vsel %vm84, %v1033, 0.0
    %v1077 = vsel %vm84, %v1034, 0.0
    %v1078 = vadd.f32 %v1076, %v1077
    %v1079 = vsel %vm84, %v1035, 0.0
    %v1080 = vadd.f32 %v1078, %v1079
    %v1081 = vsel %vm84, %v1036, 0.0
    %v1082 = vadd.f32 %v1080, %v1081
    %v1083 = vrot.slane %v1082, 4
    %v1084 = vadd.f32 %v1082, %v1083
    %v1085 = vrot.slane %v1084, 2
    %v1086 = vadd.f32 %v1084, %v1085
    %v1087 = vrot.slane %v1086, 1
    %v1088 = vadd.f32 %v1086, %v1087
    %v1093 = vsel %vm290, %v1062, %v1049
    %v1094 = vsel %vm292, %v1075, %v1093
    %v1095 = vsel %vm294, %v1088, %v1094
    %v1097 = vsel %vm297, %v1095, 0.0
    %1098 = vadd.xlane.f32.xlu0 %v1097
    %v1099 = vpop.xlane.xlu0 %1098
    %v1100 = vld [vmem:[%s4 + $0x1c] sm:$0xf]
    %v1101 = vadd.f32 %v1099, %v1100
    %v1102 = vmax.f32 %v1101, 0.0
    %v1103 = vld [vmem:[%s5 + $0x1c] sm:$0xf]
    %1105 = vset.pattern.permute.xlu0 0
    %1106 = vperm.xlu0 %1105, %v1102
    %v1107 = vpop.permute.xlu0 %1106
    %v1109 = vmul.f32 %v1103, %v1107
    %v1110 = vsel %vm311, %v1109, 0.0
    %v1111 = vrot.slane %v1110, 4
    %v1112 = vadd.f32 %v1110, %v1111
    %v1113 = vrot.slane %v1112, 2
    %v1114 = vadd.f32 %v1112, %v1113
    %v1115 = vrot.slane %v1114, 1
    %v1116 = vadd.f32 %v1114, %v1115
    %v1117 = vadd.f32 %v1003, %v1116
    %vm1118 = vcmask 57344
    %1119 = vst.msk [vmem:[#allocation2] sm:$0x1] %vm1118, %v1117
    %v1121 = vlaneseq
    %v1122 = vshrl.u32 %v1121, 7
    %v1123 = vsub.s32 0, %v1122
    %v1124 = vrot.slane %v1117, %v1123
    %1125 = vrot.lane.b32.xlu0 %v1124, 120
    %v1126 = vpop.permute.xlu0 %1125
    %1128 = vst.msk [vmem:[#allocation4] sm:$0x1] %vm1118, %v1126
    %v1129 = vld [vmem:[%s6] sm:$0x1]
    %v1130 = vld [vmem:[%s3] sm:$0xff]
    %v1131 = vld [vmem:[%s3 + $0x8] sm:$0xff]
    %v1132 = vld [vmem:[%s3 + $0x10] sm:$0xff]
    %v1133 = vld [vmem:[%s3 + $0x18] sm:$0xff]
    %v1134 = vld [vmem:[%s3 + $0x20] sm:$0xff]
    %v1135 = vld [vmem:[%s3 + $0x28] sm:$0xff]
    %v1136 = vld [vmem:[%s3 + $0x30] sm:$0xff]
    %v1137 = vld [vmem:[%s3 + $0x38] sm:$0xff]
    %v1138 = vld [vmem:[%s3 + $0x40] sm:$0xff]
    %v1139 = vld [vmem:[%s3 + $0x48] sm:$0xff]
    %v1140 = vld [vmem:[%s3 + $0x50] sm:$0xff]
    %v1141 = vld [vmem:[%s3 + $0x58] sm:$0xff]
    %v1142 = vld [vmem:[%s3 + $0x60] sm:$0xff]
    %v1143 = vld [vmem:[%s3 + $0x68] sm:$0xff]
    %v1144 = vld [vmem:[%s3 + $0x70] sm:$0xff]
    %v1145 = vld [vmem:[%s3 + $0x78] sm:$0xff]
    %1154 = vrot.lane.b32.xlu0 %v193, 28
    %v1155 = vpop.permute.xlu0 %1154
    %1156 = vrot.lane.b32.xlu0 %v194, 28
    %v1157 = vpop.permute.xlu0 %1156
    %1158 = vrot.lane.b32.xlu0 %v195, 28
    %v1159 = vpop.permute.xlu0 %1158
    %1160 = vrot.lane.b32.xlu0 %v196, 28
    %v1161 = vpop.permute.xlu0 %1160
    %1162 = vrot.lane.b32.xlu0 %v197, 28
    %v1163 = vpop.permute.xlu0 %1162
    %1164 = vrot.lane.b32.xlu0 %v198, 28
    %v1165 = vpop.permute.xlu0 %1164
    %1166 = vrot.lane.b32.xlu0 %v199, 28
    %v1167 = vpop.permute.xlu0 %1166
    %1168 = vrot.lane.b32.xlu0 %v200, 28
    %v1169 = vpop.permute.xlu0 %1168
    %vm1170 = vcmask 228352
    %v1171 = vsel %vm1170, %v1155, %v1157
    %v1172 = vsel %vm1170, %v1159, %v1161
    %v1173 = vsel %vm1170, %v1163, %v1165
    %v1174 = vsel %vm1170, %v1167, %v1169
    %v1179 = vmul.f32 %v1130, %v1171
    %v1180 = vmul.f32 %v1131, %v1172
    %v1181 = vmul.f32 %v1132, %v1173
    %v1182 = vmul.f32 %v1133, %v1174
    %v1183 = vmul.f32 %v1134, %v1171
    %v1184 = vmul.f32 %v1135, %v1172
    %v1185 = vmul.f32 %v1136, %v1173
    %v1186 = vmul.f32 %v1137, %v1174
    %v1187 = vmul.f32 %v1138, %v1171
    %v1188 = vmul.f32 %v1139, %v1172
    %v1189 = vmul.f32 %v1140, %v1173
    %v1190 = vmul.f32 %v1141, %v1174
    %v1191 = vmul.f32 %v1142, %v1171
    %v1192 = vmul.f32 %v1143, %v1172
    %v1193 = vmul.f32 %v1144, %v1173
    %v1194 = vmul.f32 %v1145, %v1174
    %v1195 = vsel %vm84, %v1179, 0.0
    %v1196 = vsel %vm84, %v1180, 0.0
    %v1197 = vadd.f32 %v1195, %v1196
    %v1198 = vsel %vm84, %v1181, 0.0
    %v1199 = vadd.f32 %v1197, %v1198
    %v1200 = vsel %vm84, %v1182, 0.0
    %v1201 = vadd.f32 %v1199, %v1200
    %v1202 = vrot.slane %v1201, 4
    %v1203 = vadd.f32 %v1201, %v1202
    %v1204 = vrot.slane %v1203, 2
    %v1205 = vadd.f32 %v1203, %v1204
    %v1206 = vrot.slane %v1205, 1
    %v1207 = vadd.f32 %v1205, %v1206
    %v1208 = vsel %vm84, %v1183, 0.0
    %v1209 = vsel %vm84, %v1184, 0.0
    %v1210 = vadd.f32 %v1208, %v1209
    %v1211 = vsel %vm84, %v1185, 0.0
    %v1212 = vadd.f32 %v1210, %v1211
    %v1213 = vsel %vm84, %v1186, 0.0
    %v1214 = vadd.f32 %v1212, %v1213
    %v1215 = vrot.slane %v1214, 4
    %v1216 = vadd.f32 %v1214, %v1215
    %v1217 = vrot.slane %v1216, 2
    %v1218 = vadd.f32 %v1216, %v1217
    %v1219 = vrot.slane %v1218, 1
    %v1220 = vadd.f32 %v1218, %v1219
    %v1221 = vsel %vm84, %v1187, 0.0
    %v1222 = vsel %vm84, %v1188, 0.0
    %v1223 = vadd.f32 %v1221, %v1222
    %v1224 = vsel %vm84, %v1189, 0.0
    %v1225 = vadd.f32 %v1223, %v1224
    %v1226 = vsel %vm84, %v1190, 0.0
    %v1227 = vadd.f32 %v1225, %v1226
    %v1228 = vrot.slane %v1227, 4
    %v1229 = vadd.f32 %v1227, %v1228
    %v1230 = vrot.slane %v1229, 2
    %v1231 = vadd.f32 %v1229, %v1230
    %v1232 = vrot.slane %v1231, 1
    %v1233 = vadd.f32 %v1231, %v1232
    %v1234 = vsel %vm84, %v1191, 0.0
    %v1235 = vsel %vm84, %v1192, 0.0
    %v1236 = vadd.f32 %v1234, %v1235
    %v1237 = vsel %vm84, %v1193, 0.0
    %v1238 = vadd.f32 %v1236, %v1237
    %v1239 = vsel %vm84, %v1194, 0.0
    %v1240 = vadd.f32 %v1238, %v1239
    %v1241 = vrot.slane %v1240, 4
    %v1242 = vadd.f32 %v1240, %v1241
    %v1243 = vrot.slane %v1242, 2
    %v1244 = vadd.f32 %v1242, %v1243
    %v1245 = vrot.slane %v1244, 1
    %v1246 = vadd.f32 %v1244, %v1245
    %v1251 = vsel %vm290, %v1220, %v1207
    %v1252 = vsel %vm292, %v1233, %v1251
    %v1253 = vsel %vm294, %v1246, %v1252
    %v1255 = vsel %vm297, %v1253, 0.0
    %1256 = vadd.xlane.f32.xlu0 %v1255
    %v1257 = vpop.xlane.xlu0 %1256
    %v1258 = vld [vmem:[%s4] sm:$0xf]
    %v1259 = vadd.f32 %v1257, %v1258
    %v1260 = vmax.f32 %v1259, 0.0
    %v1261 = vld [vmem:[%s5] sm:$0xf]
    %1263 = vset.pattern.permute.xlu0 0
    %1264 = vperm.xlu0 %1263, %v1260
    %v1265 = vpop.permute.xlu0 %1264
    %v1267 = vmul.f32 %v1261, %v1265
    %v1268 = vsel %vm311, %v1267, 0.0
    %v1269 = vrot.slane %v1268, 4
    %v1270 = vadd.f32 %v1268, %v1269
    %v1271 = vrot.slane %v1270, 2
    %v1272 = vadd.f32 %v1270, %v1271
    %v1273 = vrot.slane %v1272, 1
    %v1274 = vadd.f32 %v1272, %v1273
    %v1275 = vadd.f32 %v1129, %v1274
    %v1276 = vld [vmem:[%s320] sm:$0xff]
    %v1277 = vld [vmem:[%s320 + $0x8] sm:$0xff]
    %v1278 = vld [vmem:[%s320 + $0x10] sm:$0xff]
    %v1279 = vld [vmem:[%s320 + $0x18] sm:$0xff]
    %v1280 = vld [vmem:[%s320 + $0x20] sm:$0xff]
    %v1281 = vld [vmem:[%s320 + $0x28] sm:$0xff]
    %v1282 = vld [vmem:[%s320 + $0x30] sm:$0xff]
    %v1283 = vld [vmem:[%s320 + $0x38] sm:$0xff]
    %v1284 = vld [vmem:[%s320 + $0x40] sm:$0xff]
    %v1285 = vld [vmem:[%s320 + $0x48] sm:$0xff]
    %v1286 = vld [vmem:[%s320 + $0x50] sm:$0xff]
    %v1287 = vld [vmem:[%s320 + $0x58] sm:$0xff]
    %v1288 = vld [vmem:[%s320 + $0x60] sm:$0xff]
    %v1289 = vld [vmem:[%s320 + $0x68] sm:$0xff]
    %v1290 = vld [vmem:[%s320 + $0x70] sm:$0xff]
    %v1291 = vld [vmem:[%s320 + $0x78] sm:$0xff]
    %v1292 = vmul.f32 %v1276, %v1171
    %v1293 = vmul.f32 %v1277, %v1172
    %v1294 = vmul.f32 %v1278, %v1173
    %v1295 = vmul.f32 %v1279, %v1174
    %v1296 = vmul.f32 %v1280, %v1171
    %v1297 = vmul.f32 %v1281, %v1172
    %v1298 = vmul.f32 %v1282, %v1173
    %v1299 = vmul.f32 %v1283, %v1174
    %v1300 = vmul.f32 %v1284, %v1171
    %v1301 = vmul.f32 %v1285, %v1172
    %v1302 = vmul.f32 %v1286, %v1173
    %v1303 = vmul.f32 %v1287, %v1174
    %v1304 = vmul.f32 %v1288, %v1171
    %v1305 = vmul.f32 %v1289, %v1172
    %v1306 = vmul.f32 %v1290, %v1173
    %v1307 = vmul.f32 %v1291, %v1174
    %v1308 = vsel %vm84, %v1292, 0.0
    %v1309 = vsel %vm84, %v1293, 0.0
    %v1310 = vadd.f32 %v1308, %v1309
    %v1311 = vsel %vm84, %v1294, 0.0
    %v1312 = vadd.f32 %v1310, %v1311
    %v1313 = vsel %vm84, %v1295, 0.0
    %v1314 = vadd.f32 %v1312, %v1313
    %v1315 = vrot.slane %v1314, 4
    %v1316 = vadd.f32 %v1314, %v1315
    %v1317 = vrot.slane %v1316, 2
    %v1318 = vadd.f32 %v1316, %v1317
    %v1319 = vrot.slane %v1318, 1
    %v1320 = vadd.f32 %v1318, %v1319
    %v1321 = vsel %vm84, %v1296, 0.0
    %v1322 = vsel %vm84, %v1297, 0.0
    %v1323 = vadd.f32 %v1321, %v1322
    %v1324 = vsel %vm84, %v1298, 0.0
    %v1325 = vadd.f32 %v1323, %v1324
    %v1326 = vsel %vm84, %v1299, 0.0
    %v1327 = vadd.f32 %v1325, %v1326
    %v1328 = vrot.slane %v1327, 4
    %v1329 = vadd.f32 %v1327, %v1328
    %v1330 = vrot.slane %v1329, 2
    %v1331 = vadd.f32 %v1329, %v1330
    %v1332 = vrot.slane %v1331, 1
    %v1333 = vadd.f32 %v1331, %v1332
    %v1334 = vsel %vm84, %v1300, 0.0
    %v1335 = vsel %vm84, %v1301, 0.0
    %v1336 = vadd.f32 %v1334, %v1335
    %v1337 = vsel %vm84, %v1302, 0.0
    %v1338 = vadd.f32 %v1336, %v1337
    %v1339 = vsel %vm84, %v1303, 0.0
    %v1340 = vadd.f32 %v1338, %v1339
    %v1341 = vrot.slane %v1340, 4
    %v1342 = vadd.f32 %v1340, %v1341
    %v1343 = vrot.slane %v1342, 2
    %v1344 = vadd.f32 %v1342, %v1343
    %v1345 = vrot.slane %v1344, 1
    %v1346 = vadd.f32 %v1344, %v1345
    %v1347 = vsel %vm84, %v1304, 0.0
    %v1348 = vsel %vm84, %v1305, 0.0
    %v1349 = vadd.f32 %v1347, %v1348
    %v1350 = vsel %vm84, %v1306, 0.0
    %v1351 = vadd.f32 %v1349, %v1350
    %v1352 = vsel %vm84, %v1307, 0.0
    %v1353 = vadd.f32 %v1351, %v1352
    %v1354 = vrot.slane %v1353, 4
    %v1355 = vadd.f32 %v1353, %v1354
    %v1356 = vrot.slane %v1355, 2
    %v1357 = vadd.f32 %v1355, %v1356
    %v1358 = vrot.slane %v1357, 1
    %v1359 = vadd.f32 %v1357, %v1358
    %v1364 = vsel %vm290, %v1333, %v1320
    %v1365 = vsel %vm292, %v1346, %v1364
    %v1366 = vsel %vm294, %v1359, %v1365
    %v1368 = vsel %vm297, %v1366, 0.0
    %1369 = vadd.xlane.f32.xlu0 %v1368
    %v1370 = vpop.xlane.xlu0 %1369
    %v1371 = vld [vmem:[%s4 + $0x4] sm:$0xf]
    %v1372 = vadd.f32 %v1370, %v1371
    %v1373 = vmax.f32 %v1372, 0.0
    %v1374 = vld [vmem:[%s5 + $0x4] sm:$0xf]
    %1376 = vset.pattern.permute.xlu0 0
    %1377 = vperm.xlu0 %1376, %v1373
    %v1378 = vpop.permute.xlu0 %1377
    %v1380 = vmul.f32 %v1374, %v1378
    %v1381 = vsel %vm311, %v1380, 0.0
    %v1382 = vrot.slane %v1381, 4
    %v1383 = vadd.f32 %v1381, %v1382
    %v1384 = vrot.slane %v1383, 2
    %v1385 = vadd.f32 %v1383, %v1384
    %v1386 = vrot.slane %v1385, 1
    %v1387 = vadd.f32 %v1385, %v1386
    %v1388 = vadd.f32 %v1275, %v1387
    %v1389 = vld [vmem:[%s434] sm:$0xff]
    %v1390 = vld [vmem:[%s434 + $0x8] sm:$0xff]
    %v1391 = vld [vmem:[%s434 + $0x10] sm:$0xff]
    %v1392 = vld [vmem:[%s434 + $0x18] sm:$0xff]
    %v1393 = vld [vmem:[%s434 + $0x20] sm:$0xff]
    %v1394 = vld [vmem:[%s434 + $0x28] sm:$0xff]
    %v1395 = vld [vmem:[%s434 + $0x30] sm:$0xff]
    %v1396 = vld [vmem:[%s434 + $0x38] sm:$0xff]
    %v1397 = vld [vmem:[%s434 + $0x40] sm:$0xff]
    %v1398 = vld [vmem:[%s434 + $0x48] sm:$0xff]
    %v1399 = vld [vmem:[%s434 + $0x50] sm:$0xff]
    %v1400 = vld [vmem:[%s434 + $0x58] sm:$0xff]
    %v1401 = vld [vmem:[%s434 + $0x60] sm:$0xff]
    %v1402 = vld [vmem:[%s434 + $0x68] sm:$0xff]
    %v1403 = vld [vmem:[%s434 + $0x70] sm:$0xff]
    %v1404 = vld [vmem:[%s434 + $0x78] sm:$0xff]
    %v1405 = vmul.f32 %v1389, %v1171
    %v1406 = vmul.f32 %v1390, %v1172
    %v1407 = vmul.f32 %v1391, %v1173
    %v1408 = vmul.f32 %v1392, %v1174
    %v1409 = vmul.f32 %v1393, %v1171
    %v1410 = vmul.f32 %v1394, %v1172
    %v1411 = vmul.f32 %v1395, %v1173
    %v1412 = vmul.f32 %v1396, %v1174
    %v1413 = vmul.f32 %v1397, %v1171
    %v1414 = vmul.f32 %v1398, %v1172
    %v1415 = vmul.f32 %v1399, %v1173
    %v1416 = vmul.f32 %v1400, %v1174
    %v1417 = vmul.f32 %v1401, %v1171
    %v1418 = vmul.f32 %v1402, %v1172
    %v1419 = vmul.f32 %v1403, %v1173
    %v1420 = vmul.f32 %v1404, %v1174
    %v1421 = vsel %vm84, %v1405, 0.0
    %v1422 = vsel %vm84, %v1406, 0.0
    %v1423 = vadd.f32 %v1421, %v1422
    %v1424 = vsel %vm84, %v1407, 0.0
    %v1425 = vadd.f32 %v1423, %v1424
    %v1426 = vsel %vm84, %v1408, 0.0
    %v1427 = vadd.f32 %v1425, %v1426
    %v1428 = vrot.slane %v1427, 4
    %v1429 = vadd.f32 %v1427, %v1428
    %v1430 = vrot.slane %v1429, 2
    %v1431 = vadd.f32 %v1429, %v1430
    %v1432 = vrot.slane %v1431, 1
    %v1433 = vadd.f32 %v1431, %v1432
    %v1434 = vsel %vm84, %v1409, 0.0
    %v1435 = vsel %vm84, %v1410, 0.0
    %v1436 = vadd.f32 %v1434, %v1435
    %v1437 = vsel %vm84, %v1411, 0.0
    %v1438 = vadd.f32 %v1436, %v1437
    %v1439 = vsel %vm84, %v1412, 0.0
    %v1440 = vadd.f32 %v1438, %v1439
    %v1441 = vrot.slane %v1440, 4
    %v1442 = vadd.f32 %v1440, %v1441
    %v1443 = vrot.slane %v1442, 2
    %v1444 = vadd.f32 %v1442, %v1443
    %v1445 = vrot.slane %v1444, 1
    %v1446 = vadd.f32 %v1444, %v1445
    %v1447 = vsel %vm84, %v1413, 0.0
    %v1448 = vsel %vm84, %v1414, 0.0
    %v1449 = vadd.f32 %v1447, %v1448
    %v1450 = vsel %vm84, %v1415, 0.0
    %v1451 = vadd.f32 %v1449, %v1450
    %v1452 = vsel %vm84, %v1416, 0.0
    %v1453 = vadd.f32 %v1451, %v1452
    %v1454 = vrot.slane %v1453, 4
    %v1455 = vadd.f32 %v1453, %v1454
    %v1456 = vrot.slane %v1455, 2
    %v1457 = vadd.f32 %v1455, %v1456
    %v1458 = vrot.slane %v1457, 1
    %v1459 = vadd.f32 %v1457, %v1458
    %v1460 = vsel %vm84, %v1417, 0.0
    %v1461 = vsel %vm84, %v1418, 0.0
    %v1462 = vadd.f32 %v1460, %v1461
    %v1463 = vsel %vm84, %v1419, 0.0
    %v1464 = vadd.f32 %v1462, %v1463
    %v1465 = vsel %vm84, %v1420, 0.0
    %v1466 = vadd.f32 %v1464, %v1465
    %v1467 = vrot.slane %v1466, 4
    %v1468 = vadd.f32 %v1466, %v1467
    %v1469 = vrot.slane %v1468, 2
    %v1470 = vadd.f32 %v1468, %v1469
    %v1471 = vrot.slane %v1470, 1
    %v1472 = vadd.f32 %v1470, %v1471
    %v1477 = vsel %vm290, %v1446, %v1433
    %v1478 = vsel %vm292, %v1459, %v1477
    %v1479 = vsel %vm294, %v1472, %v1478
    %v1481 = vsel %vm297, %v1479, 0.0
    %1482 = vadd.xlane.f32.xlu0 %v1481
    %v1483 = vpop.xlane.xlu0 %1482
    %v1484 = vld [vmem:[%s4 + $0x8] sm:$0xf]
    %v1485 = vadd.f32 %v1483, %v1484
    %v1486 = vmax.f32 %v1485, 0.0
    %v1487 = vld [vmem:[%s5 + $0x8] sm:$0xf]
    %1489 = vset.pattern.permute.xlu0 0
    %1490 = vperm.xlu0 %1489, %v1486
    %v1491 = vpop.permute.xlu0 %1490
    %v1493 = vmul.f32 %v1487, %v1491
    %v1494 = vsel %vm311, %v1493, 0.0
    %v1495 = vrot.slane %v1494, 4
    %v1496 = vadd.f32 %v1494, %v1495
    %v1497 = vrot.slane %v1496, 2
    %v1498 = vadd.f32 %v1496, %v1497
    %v1499 = vrot.slane %v1498, 1
    %v1500 = vadd.f32 %v1498, %v1499
    %v1501 = vadd.f32 %v1388, %v1500
    %v1502 = vld [vmem:[%s548] sm:$0xff]
    %v1503 = vld [vmem:[%s548 + $0x8] sm:$0xff]
    %v1504 = vld [vmem:[%s548 + $0x10] sm:$0xff]
    %v1505 = vld [vmem:[%s548 + $0x18] sm:$0xff]
    %v1506 = vld [vmem:[%s548 + $0x20] sm:$0xff]
    %v1507 = vld [vmem:[%s548 + $0x28] sm:$0xff]
    %v1508 = vld [vmem:[%s548 + $0x30] sm:$0xff]
    %v1509 = vld [vmem:[%s548 + $0x38] sm:$0xff]
    %v1510 = vld [vmem:[%s548 + $0x40] sm:$0xff]
    %v1511 = vld [vmem:[%s548 + $0x48] sm:$0xff]
    %v1512 = vld [vmem:[%s548 + $0x50] sm:$0xff]
    %v1513 = vld [vmem:[%s548 + $0x58] sm:$0xff]
    %v1514 = vld [vmem:[%s548 + $0x60] sm:$0xff]
    %v1515 = vld [vmem:[%s548 + $0x68] sm:$0xff]
    %v1516 = vld [vmem:[%s548 + $0x70] sm:$0xff]
    %v1517 = vld [vmem:[%s548 + $0x78] sm:$0xff]
    %v1518 = vmul.f32 %v1502, %v1171
    %v1519 = vmul.f32 %v1503, %v1172
    %v1520 = vmul.f32 %v1504, %v1173
    %v1521 = vmul.f32 %v1505, %v1174
    %v1522 = vmul.f32 %v1506, %v1171
    %v1523 = vmul.f32 %v1507, %v1172
    %v1524 = vmul.f32 %v1508, %v1173
    %v1525 = vmul.f32 %v1509, %v1174
    %v1526 = vmul.f32 %v1510, %v1171
    %v1527 = vmul.f32 %v1511, %v1172
    %v1528 = vmul.f32 %v1512, %v1173
    %v1529 = vmul.f32 %v1513, %v1174
    %v1530 = vmul.f32 %v1514, %v1171
    %v1531 = vmul.f32 %v1515, %v1172
    %v1532 = vmul.f32 %v1516, %v1173
    %v1533 = vmul.f32 %v1517, %v1174
    %v1534 = vsel %vm84, %v1518, 0.0
    %v1535 = vsel %vm84, %v1519, 0.0
    %v1536 = vadd.f32 %v1534, %v1535
    %v1537 = vsel %vm84, %v1520, 0.0
    %v1538 = vadd.f32 %v1536, %v1537
    %v1539 = vsel %vm84, %v1521, 0.0
    %v1540 = vadd.f32 %v1538, %v1539
    %v1541 = vrot.slane %v1540, 4
    %v1542 = vadd.f32 %v1540, %v1541
    %v1543 = vrot.slane %v1542, 2
    %v1544 = vadd.f32 %v1542, %v1543
    %v1545 = vrot.slane %v1544, 1
    %v1546 = vadd.f32 %v1544, %v1545
    %v1547 = vsel %vm84, %v1522, 0.0
    %v1548 = vsel %vm84, %v1523, 0.0
    %v1549 = vadd.f32 %v1547, %v1548
    %v1550 = vsel %vm84, %v1524, 0.0
    %v1551 = vadd.f32 %v1549, %v1550
    %v1552 = vsel %vm84, %v1525, 0.0
    %v1553 = vadd.f32 %v1551, %v1552
    %v1554 = vrot.slane %v1553, 4
    %v1555 = vadd.f32 %v1553, %v1554
    %v1556 = vrot.slane %v1555, 2
    %v1557 = vadd.f32 %v1555, %v1556
    %v1558 = vrot.slane %v1557, 1
    %v1559 = vadd.f32 %v1557, %v1558
    %v1560 = vsel %vm84, %v1526, 0.0
    %v1561 = vsel %vm84, %v1527, 0.0
    %v1562 = vadd.f32 %v1560, %v1561
    %v1563 = vsel %vm84, %v1528, 0.0
    %v1564 = vadd.f32 %v1562, %v1563
    %v1565 = vsel %vm84, %v1529, 0.0
    %v1566 = vadd.f32 %v1564, %v1565
    %v1567 = vrot.slane %v1566, 4
    %v1568 = vadd.f32 %v1566, %v1567
    %v1569 = vrot.slane %v1568, 2
    %v1570 = vadd.f32 %v1568, %v1569
    %v1571 = vrot.slane %v1570, 1
    %v1572 = vadd.f32 %v1570, %v1571
    %v1573 = vsel %vm84, %v1530, 0.0
    %v1574 = vsel %vm84, %v1531, 0.0
    %v1575 = vadd.f32 %v1573, %v1574
    %v1576 = vsel %vm84, %v1532, 0.0
    %v1577 = vadd.f32 %v1575, %v1576
    %v1578 = vsel %vm84, %v1533, 0.0
    %v1579 = vadd.f32 %v1577, %v1578
    %v1580 = vrot.slane %v1579, 4
    %v1581 = vadd.f32 %v1579, %v1580
    %v1582 = vrot.slane %v1581, 2
    %v1583 = vadd.f32 %v1581, %v1582
    %v1584 = vrot.slane %v1583, 1
    %v1585 = vadd.f32 %v1583, %v1584
    %v1590 = vsel %vm290, %v1559, %v1546
    %v1591 = vsel %vm292, %v1572, %v1590
    %v1592 = vsel %vm294, %v1585, %v1591
    %v1594 = vsel %vm297, %v1592, 0.0
    %1595 = vadd.xlane.f32.xlu0 %v1594
    %v1596 = vpop.xlane.xlu0 %1595
    %v1597 = vld [vmem:[%s4 + $0xc] sm:$0xf]
    %v1598 = vadd.f32 %v1596, %v1597
    %v1599 = vmax.f32 %v1598, 0.0
    %v1600 = vld [vmem:[%s5 + $0xc] sm:$0xf]
    %1602 = vset.pattern.permute.xlu0 0
    %1603 = vperm.xlu0 %1602, %v1599
    %v1604 = vpop.permute.xlu0 %1603
    %v1606 = vmul.f32 %v1600, %v1604
    %v1607 = vsel %vm311, %v1606, 0.0
    %v1608 = vrot.slane %v1607, 4
    %v1609 = vadd.f32 %v1607, %v1608
    %v1610 = vrot.slane %v1609, 2
    %v1611 = vadd.f32 %v1609, %v1610
    %v1612 = vrot.slane %v1611, 1
    %v1613 = vadd.f32 %v1611, %v1612
    %v1614 = vadd.f32 %v1501, %v1613
    %v1615 = vld [vmem:[%s662] sm:$0xff]
    %v1616 = vld [vmem:[%s662 + $0x8] sm:$0xff]
    %v1617 = vld [vmem:[%s662 + $0x10] sm:$0xff]
    %v1618 = vld [vmem:[%s662 + $0x18] sm:$0xff]
    %v1619 = vld [vmem:[%s662 + $0x20] sm:$0xff]
    %v1620 = vld [vmem:[%s662 + $0x28] sm:$0xff]
    %v1621 = vld [vmem:[%s662 + $0x30] sm:$0xff]
    %v1622 = vld [vmem:[%s662 + $0x38] sm:$0xff]
    %v1623 = vld [vmem:[%s662 + $0x40] sm:$0xff]
    %v1624 = vld [vmem:[%s662 + $0x48] sm:$0xff]
    %v1625 = vld [vmem:[%s662 + $0x50] sm:$0xff]
    %v1626 = vld [vmem:[%s662 + $0x58] sm:$0xff]
    %v1627 = vld [vmem:[%s662 + $0x60] sm:$0xff]
    %v1628 = vld [vmem:[%s662 + $0x68] sm:$0xff]
    %v1629 = vld [vmem:[%s662 + $0x70] sm:$0xff]
    %v1630 = vld [vmem:[%s662 + $0x78] sm:$0xff]
    %v1631 = vmul.f32 %v1615, %v1171
    %v1632 = vmul.f32 %v1616, %v1172
    %v1633 = vmul.f32 %v1617, %v1173
    %v1634 = vmul.f32 %v1618, %v1174
    %v1635 = vmul.f32 %v1619, %v1171
    %v1636 = vmul.f32 %v1620, %v1172
    %v1637 = vmul.f32 %v1621, %v1173
    %v1638 = vmul.f32 %v1622, %v1174
    %v1639 = vmul.f32 %v1623, %v1171
    %v1640 = vmul.f32 %v1624, %v1172
    %v1641 = vmul.f32 %v1625, %v1173
    %v1642 = vmul.f32 %v1626, %v1174
    %v1643 = vmul.f32 %v1627, %v1171
    %v1644 = vmul.f32 %v1628, %v1172
    %v1645 = vmul.f32 %v1629, %v1173
    %v1646 = vmul.f32 %v1630, %v1174
    %v1647 = vsel %vm84, %v1631, 0.0
    %v1648 = vsel %vm84, %v1632, 0.0
    %v1649 = vadd.f32 %v1647, %v1648
    %v1650 = vsel %vm84, %v1633, 0.0
    %v1651 = vadd.f32 %v1649, %v1650
    %v1652 = vsel %vm84, %v1634, 0.0
    %v1653 = vadd.f32 %v1651, %v1652
    %v1654 = vrot.slane %v1653, 4
    %v1655 = vadd.f32 %v1653, %v1654
    %v1656 = vrot.slane %v1655, 2
    %v1657 = vadd.f32 %v1655, %v1656
    %v1658 = vrot.slane %v1657, 1
    %v1659 = vadd.f32 %v1657, %v1658
    %v1660 = vsel %vm84, %v1635, 0.0
    %v1661 = vsel %vm84, %v1636, 0.0
    %v1662 = vadd.f32 %v1660, %v1661
    %v1663 = vsel %vm84, %v1637, 0.0
    %v1664 = vadd.f32 %v1662, %v1663
    %v1665 = vsel %vm84, %v1638, 0.0
    %v1666 = vadd.f32 %v1664, %v1665
    %v1667 = vrot.slane %v1666, 4
    %v1668 = vadd.f32 %v1666, %v1667
    %v1669 = vrot.slane %v1668, 2
    %v1670 = vadd.f32 %v1668, %v1669
    %v1671 = vrot.slane %v1670, 1
    %v1672 = vadd.f32 %v1670, %v1671
    %v1673 = vsel %vm84, %v1639, 0.0
    %v1674 = vsel %vm84, %v1640, 0.0
    %v1675 = vadd.f32 %v1673, %v1674
    %v1676 = vsel %vm84, %v1641, 0.0
    %v1677 = vadd.f32 %v1675, %v1676
    %v1678 = vsel %vm84, %v1642, 0.0
    %v1679 = vadd.f32 %v1677, %v1678
    %v1680 = vrot.slane %v1679, 4
    %v1681 = vadd.f32 %v1679, %v1680
    %v1682 = vrot.slane %v1681, 2
    %v1683 = vadd.f32 %v1681, %v1682
    %v1684 = vrot.slane %v1683, 1
    %v1685 = vadd.f32 %v1683, %v1684
    %v1686 = vsel %vm84, %v1643, 0.0
    %v1687 = vsel %vm84, %v1644, 0.0
    %v1688 = vadd.f32 %v1686, %v1687
    %v1689 = vsel %vm84, %v1645, 0.0
    %v1690 = vadd.f32 %v1688, %v1689
    %v1691 = vsel %vm84, %v1646, 0.0
    %v1692 = vadd.f32 %v1690, %v1691
    %v1693 = vrot.slane %v1692, 4
    %v1694 = vadd.f32 %v1692, %v1693
    %v1695 = vrot.slane %v1694, 2
    %v1696 = vadd.f32 %v1694, %v1695
    %v1697 = vrot.slane %v1696, 1
    %v1698 = vadd.f32 %v1696, %v1697
    %v1703 = vsel %vm290, %v1672, %v1659
    %v1704 = vsel %vm292, %v1685, %v1703
    %v1705 = vsel %vm294, %v1698, %v1704
    %v1707 = vsel %vm297, %v1705, 0.0
    %1708 = vadd.xlane.f32.xlu0 %v1707
    %v1709 = vpop.xlane.xlu0 %1708
    %v1710 = vld [vmem:[%s4 + $0x10] sm:$0xf]
    %v1711 = vadd.f32 %v1709, %v1710
    %v1712 = vmax.f32 %v1711, 0.0
    %v1713 = vld [vmem:[%s5 + $0x10] sm:$0xf]
    %1715 = vset.pattern.permute.xlu0 0
    %1716 = vperm.xlu0 %1715, %v1712
    %v1717 = vpop.permute.xlu0 %1716
    %v1719 = vmul.f32 %v1713, %v1717
    %v1720 = vsel %vm311, %v1719, 0.0
    %v1721 = vrot.slane %v1720, 4
    %v1722 = vadd.f32 %v1720, %v1721
    %v1723 = vrot.slane %v1722, 2
    %v1724 = vadd.f32 %v1722, %v1723
    %v1725 = vrot.slane %v1724, 1
    %v1726 = vadd.f32 %v1724, %v1725
    %v1727 = vadd.f32 %v1614, %v1726
    %v1728 = vld [vmem:[%s776] sm:$0xff]
    %v1729 = vld [vmem:[%s776 + $0x8] sm:$0xff]
    %v1730 = vld [vmem:[%s776 + $0x10] sm:$0xff]
    %v1731 = vld [vmem:[%s776 + $0x18] sm:$0xff]
    %v1732 = vld [vmem:[%s776 + $0x20] sm:$0xff]
    %v1733 = vld [vmem:[%s776 + $0x28] sm:$0xff]
    %v1734 = vld [vmem:[%s776 + $0x30] sm:$0xff]
    %v1735 = vld [vmem:[%s776 + $0x38] sm:$0xff]
    %v1736 = vld [vmem:[%s776 + $0x40] sm:$0xff]
    %v1737 = vld [vmem:[%s776 + $0x48] sm:$0xff]
    %v1738 = vld [vmem:[%s776 + $0x50] sm:$0xff]
    %v1739 = vld [vmem:[%s776 + $0x58] sm:$0xff]
    %v1740 = vld [vmem:[%s776 + $0x60] sm:$0xff]
    %v1741 = vld [vmem:[%s776 + $0x68] sm:$0xff]
    %v1742 = vld [vmem:[%s776 + $0x70] sm:$0xff]
    %v1743 = vld [vmem:[%s776 + $0x78] sm:$0xff]
    %v1744 = vmul.f32 %v1728, %v1171
    %v1745 = vmul.f32 %v1729, %v1172
    %v1746 = vmul.f32 %v1730, %v1173
    %v1747 = vmul.f32 %v1731, %v1174
    %v1748 = vmul.f32 %v1732, %v1171
    %v1749 = vmul.f32 %v1733, %v1172
    %v1750 = vmul.f32 %v1734, %v1173
    %v1751 = vmul.f32 %v1735, %v1174
    %v1752 = vmul.f32 %v1736, %v1171
    %v1753 = vmul.f32 %v1737, %v1172
    %v1754 = vmul.f32 %v1738, %v1173
    %v1755 = vmul.f32 %v1739, %v1174
    %v1756 = vmul.f32 %v1740, %v1171
    %v1757 = vmul.f32 %v1741, %v1172
    %v1758 = vmul.f32 %v1742, %v1173
    %v1759 = vmul.f32 %v1743, %v1174
    %v1760 = vsel %vm84, %v1744, 0.0
    %v1761 = vsel %vm84, %v1745, 0.0
    %v1762 = vadd.f32 %v1760, %v1761
    %v1763 = vsel %vm84, %v1746, 0.0
    %v1764 = vadd.f32 %v1762, %v1763
    %v1765 = vsel %vm84, %v1747, 0.0
    %v1766 = vadd.f32 %v1764, %v1765
    %v1767 = vrot.slane %v1766, 4
    %v1768 = vadd.f32 %v1766, %v1767
    %v1769 = vrot.slane %v1768, 2
    %v1770 = vadd.f32 %v1768, %v1769
    %v1771 = vrot.slane %v1770, 1
    %v1772 = vadd.f32 %v1770, %v1771
    %v1773 = vsel %vm84, %v1748, 0.0
    %v1774 = vsel %vm84, %v1749, 0.0
    %v1775 = vadd.f32 %v1773, %v1774
    %v1776 = vsel %vm84, %v1750, 0.0
    %v1777 = vadd.f32 %v1775, %v1776
    %v1778 = vsel %vm84, %v1751, 0.0
    %v1779 = vadd.f32 %v1777, %v1778
    %v1780 = vrot.slane %v1779, 4
    %v1781 = vadd.f32 %v1779, %v1780
    %v1782 = vrot.slane %v1781, 2
    %v1783 = vadd.f32 %v1781, %v1782
    %v1784 = vrot.slane %v1783, 1
    %v1785 = vadd.f32 %v1783, %v1784
    %v1786 = vsel %vm84, %v1752, 0.0
    %v1787 = vsel %vm84, %v1753, 0.0
    %v1788 = vadd.f32 %v1786, %v1787
    %v1789 = vsel %vm84, %v1754, 0.0
    %v1790 = vadd.f32 %v1788, %v1789
    %v1791 = vsel %vm84, %v1755, 0.0
    %v1792 = vadd.f32 %v1790, %v1791
    %v1793 = vrot.slane %v1792, 4
    %v1794 = vadd.f32 %v1792, %v1793
    %v1795 = vrot.slane %v1794, 2
    %v1796 = vadd.f32 %v1794, %v1795
    %v1797 = vrot.slane %v1796, 1
    %v1798 = vadd.f32 %v1796, %v1797
    %v1799 = vsel %vm84, %v1756, 0.0
    %v1800 = vsel %vm84, %v1757, 0.0
    %v1801 = vadd.f32 %v1799, %v1800
    %v1802 = vsel %vm84, %v1758, 0.0
    %v1803 = vadd.f32 %v1801, %v1802
    %v1804 = vsel %vm84, %v1759, 0.0
    %v1805 = vadd.f32 %v1803, %v1804
    %v1806 = vrot.slane %v1805, 4
    %v1807 = vadd.f32 %v1805, %v1806
    %v1808 = vrot.slane %v1807, 2
    %v1809 = vadd.f32 %v1807, %v1808
    %v1810 = vrot.slane %v1809, 1
    %v1811 = vadd.f32 %v1809, %v1810
    %v1816 = vsel %vm290, %v1785, %v1772
    %v1817 = vsel %vm292, %v1798, %v1816
    %v1818 = vsel %vm294, %v1811, %v1817
    %v1820 = vsel %vm297, %v1818, 0.0
    %1821 = vadd.xlane.f32.xlu0 %v1820
    %v1822 = vpop.xlane.xlu0 %1821
    %v1823 = vld [vmem:[%s4 + $0x14] sm:$0xf]
    %v1824 = vadd.f32 %v1822, %v1823
    %v1825 = vmax.f32 %v1824, 0.0
    %v1826 = vld [vmem:[%s5 + $0x14] sm:$0xf]
    %1828 = vset.pattern.permute.xlu0 0
    %1829 = vperm.xlu0 %1828, %v1825
    %v1830 = vpop.permute.xlu0 %1829
    %v1832 = vmul.f32 %v1826, %v1830
    %v1833 = vsel %vm311, %v1832, 0.0
    %v1834 = vrot.slane %v1833, 4
    %v1835 = vadd.f32 %v1833, %v1834
    %v1836 = vrot.slane %v1835, 2
    %v1837 = vadd.f32 %v1835, %v1836
    %v1838 = vrot.slane %v1837, 1
    %v1839 = vadd.f32 %v1837, %v1838
    %v1840 = vadd.f32 %v1727, %v1839
    %v1841 = vld [vmem:[%s890] sm:$0xff]
    %v1842 = vld [vmem:[%s890 + $0x8] sm:$0xff]
    %v1843 = vld [vmem:[%s890 + $0x10] sm:$0xff]
    %v1844 = vld [vmem:[%s890 + $0x18] sm:$0xff]
    %v1845 = vld [vmem:[%s890 + $0x20] sm:$0xff]
    %v1846 = vld [vmem:[%s890 + $0x28] sm:$0xff]
    %v1847 = vld [vmem:[%s890 + $0x30] sm:$0xff]
    %v1848 = vld [vmem:[%s890 + $0x38] sm:$0xff]
    %v1849 = vld [vmem:[%s890 + $0x40] sm:$0xff]
    %v1850 = vld [vmem:[%s890 + $0x48] sm:$0xff]
    %v1851 = vld [vmem:[%s890 + $0x50] sm:$0xff]
    %v1852 = vld [vmem:[%s890 + $0x58] sm:$0xff]
    %v1853 = vld [vmem:[%s890 + $0x60] sm:$0xff]
    %v1854 = vld [vmem:[%s890 + $0x68] sm:$0xff]
    %v1855 = vld [vmem:[%s890 + $0x70] sm:$0xff]
    %v1856 = vld [vmem:[%s890 + $0x78] sm:$0xff]
    %v1857 = vmul.f32 %v1841, %v1171
    %v1858 = vmul.f32 %v1842, %v1172
    %v1859 = vmul.f32 %v1843, %v1173
    %v1860 = vmul.f32 %v1844, %v1174
    %v1861 = vmul.f32 %v1845, %v1171
    %v1862 = vmul.f32 %v1846, %v1172
    %v1863 = vmul.f32 %v1847, %v1173
    %v1864 = vmul.f32 %v1848, %v1174
    %v1865 = vmul.f32 %v1849, %v1171
    %v1866 = vmul.f32 %v1850, %v1172
    %v1867 = vmul.f32 %v1851, %v1173
    %v1868 = vmul.f32 %v1852, %v1174
    %v1869 = vmul.f32 %v1853, %v1171
    %v1870 = vmul.f32 %v1854, %v1172
    %v1871 = vmul.f32 %v1855, %v1173
    %v1872 = vmul.f32 %v1856, %v1174
    %v1873 = vsel %vm84, %v1857, 0.0
    %v1874 = vsel %vm84, %v1858, 0.0
    %v1875 = vadd.f32 %v1873, %v1874
    %v1876 = vsel %vm84, %v1859, 0.0
    %v1877 = vadd.f32 %v1875, %v1876
    %v1878 = vsel %vm84, %v1860, 0.0
    %v1879 = vadd.f32 %v1877, %v1878
    %v1880 = vrot.slane %v1879, 4
    %v1881 = vadd.f32 %v1879, %v1880
    %v1882 = vrot.slane %v1881, 2
    %v1883 = vadd.f32 %v1881, %v1882
    %v1884 = vrot.slane %v1883, 1
    %v1885 = vadd.f32 %v1883, %v1884
    %v1886 = vsel %vm84, %v1861, 0.0
    %v1887 = vsel %vm84, %v1862, 0.0
    %v1888 = vadd.f32 %v1886, %v1887
    %v1889 = vsel %vm84, %v1863, 0.0
    %v1890 = vadd.f32 %v1888, %v1889
    %v1891 = vsel %vm84, %v1864, 0.0
    %v1892 = vadd.f32 %v1890, %v1891
    %v1893 = vrot.slane %v1892, 4
    %v1894 = vadd.f32 %v1892, %v1893
    %v1895 = vrot.slane %v1894, 2
    %v1896 = vadd.f32 %v1894, %v1895
    %v1897 = vrot.slane %v1896, 1
    %v1898 = vadd.f32 %v1896, %v1897
    %v1899 = vsel %vm84, %v1865, 0.0
    %v1900 = vsel %vm84, %v1866, 0.0
    %v1901 = vadd.f32 %v1899, %v1900
    %v1902 = vsel %vm84, %v1867, 0.0
    %v1903 = vadd.f32 %v1901, %v1902
    %v1904 = vsel %vm84, %v1868, 0.0
    %v1905 = vadd.f32 %v1903, %v1904
    %v1906 = vrot.slane %v1905, 4
    %v1907 = vadd.f32 %v1905, %v1906
    %v1908 = vrot.slane %v1907, 2
    %v1909 = vadd.f32 %v1907, %v1908
    %v1910 = vrot.slane %v1909, 1
    %v1911 = vadd.f32 %v1909, %v1910
    %v1912 = vsel %vm84, %v1869, 0.0
    %v1913 = vsel %vm84, %v1870, 0.0
    %v1914 = vadd.f32 %v1912, %v1913
    %v1915 = vsel %vm84, %v1871, 0.0
    %v1916 = vadd.f32 %v1914, %v1915
    %v1917 = vsel %vm84, %v1872, 0.0
    %v1918 = vadd.f32 %v1916, %v1917
    %v1919 = vrot.slane %v1918, 4
    %v1920 = vadd.f32 %v1918, %v1919
    %v1921 = vrot.slane %v1920, 2
    %v1922 = vadd.f32 %v1920, %v1921
    %v1923 = vrot.slane %v1922, 1
    %v1924 = vadd.f32 %v1922, %v1923
    %v1929 = vsel %vm290, %v1898, %v1885
    %v1930 = vsel %vm292, %v1911, %v1929
    %v1931 = vsel %vm294, %v1924, %v1930
    %v1933 = vsel %vm297, %v1931, 0.0
    %1934 = vadd.xlane.f32.xlu0 %v1933
    %v1935 = vpop.xlane.xlu0 %1934
    %v1936 = vld [vmem:[%s4 + $0x18] sm:$0xf]
    %v1937 = vadd.f32 %v1935, %v1936
    %v1938 = vmax.f32 %v1937, 0.0
    %v1939 = vld [vmem:[%s5 + $0x18] sm:$0xf]
    %1941 = vset.pattern.permute.xlu0 0
    %1942 = vperm.xlu0 %1941, %v1938
    %v1943 = vpop.permute.xlu0 %1942
    %v1945 = vmul.f32 %v1939, %v1943
    %v1946 = vsel %vm311, %v1945, 0.0
    %v1947 = vrot.slane %v1946, 4
    %v1948 = vadd.f32 %v1946, %v1947
    %v1949 = vrot.slane %v1948, 2
    %v1950 = vadd.f32 %v1948, %v1949
    %v1951 = vrot.slane %v1950, 1
    %v1952 = vadd.f32 %v1950, %v1951
    %v1953 = vadd.f32 %v1840, %v1952
    %v1954 = vld [vmem:[%s1004] sm:$0xff]
    %v1955 = vld [vmem:[%s1004 + $0x8] sm:$0xff]
    %v1956 = vld [vmem:[%s1004 + $0x10] sm:$0xff]
    %v1957 = vld [vmem:[%s1004 + $0x18] sm:$0xff]
    %v1958 = vld [vmem:[%s1004 + $0x20] sm:$0xff]
    %v1959 = vld [vmem:[%s1004 + $0x28] sm:$0xff]
    %v1960 = vld [vmem:[%s1004 + $0x30] sm:$0xff]
    %v1961 = vld [vmem:[%s1004 + $0x38] sm:$0xff]
    %v1962 = vld [vmem:[%s1004 + $0x40] sm:$0xff]
    %v1963 = vld [vmem:[%s1004 + $0x48] sm:$0xff]
    %v1964 = vld [vmem:[%s1004 + $0x50] sm:$0xff]
    %v1965 = vld [vmem:[%s1004 + $0x58] sm:$0xff]
    %v1966 = vld [vmem:[%s1004 + $0x60] sm:$0xff]
    %v1967 = vld [vmem:[%s1004 + $0x68] sm:$0xff]
    %v1968 = vld [vmem:[%s1004 + $0x70] sm:$0xff]
    %v1969 = vld [vmem:[%s1004 + $0x78] sm:$0xff]
    %v1970 = vmul.f32 %v1954, %v1171
    %v1971 = vmul.f32 %v1955, %v1172
    %v1972 = vmul.f32 %v1956, %v1173
    %v1973 = vmul.f32 %v1957, %v1174
    %v1974 = vmul.f32 %v1958, %v1171
    %v1975 = vmul.f32 %v1959, %v1172
    %v1976 = vmul.f32 %v1960, %v1173
    %v1977 = vmul.f32 %v1961, %v1174
    %v1978 = vmul.f32 %v1962, %v1171
    %v1979 = vmul.f32 %v1963, %v1172
    %v1980 = vmul.f32 %v1964, %v1173
    %v1981 = vmul.f32 %v1965, %v1174
    %v1982 = vmul.f32 %v1966, %v1171
    %v1983 = vmul.f32 %v1967, %v1172
    %v1984 = vmul.f32 %v1968, %v1173
    %v1985 = vmul.f32 %v1969, %v1174
    %v1986 = vsel %vm84, %v1970, 0.0
    %v1987 = vsel %vm84, %v1971, 0.0
    %v1988 = vadd.f32 %v1986, %v1987
    %v1989 = vsel %vm84, %v1972, 0.0
    %v1990 = vadd.f32 %v1988, %v1989
    %v1991 = vsel %vm84, %v1973, 0.0
    %v1992 = vadd.f32 %v1990, %v1991
    %v1993 = vrot.slane %v1992, 4
    %v1994 = vadd.f32 %v1992, %v1993
    %v1995 = vrot.slane %v1994, 2
    %v1996 = vadd.f32 %v1994, %v1995
    %v1997 = vrot.slane %v1996, 1
    %v1998 = vadd.f32 %v1996, %v1997
    %v1999 = vsel %vm84, %v1974, 0.0
    %v2000 = vsel %vm84, %v1975, 0.0
    %v2001 = vadd.f32 %v1999, %v2000
    %v2002 = vsel %vm84, %v1976, 0.0
    %v2003 = vadd.f32 %v2001, %v2002
    %v2004 = vsel %vm84, %v1977, 0.0
    %v2005 = vadd.f32 %v2003, %v2004
    %v2006 = vrot.slane %v2005, 4
    %v2007 = vadd.f32 %v2005, %v2006
    %v2008 = vrot.slane %v2007, 2
    %v2009 = vadd.f32 %v2007, %v2008
    %v2010 = vrot.slane %v2009, 1
    %v2011 = vadd.f32 %v2009, %v2010
    %v2012 = vsel %vm84, %v1978, 0.0
    %v2013 = vsel %vm84, %v1979, 0.0
    %v2014 = vadd.f32 %v2012, %v2013
    %v2015 = vsel %vm84, %v1980, 0.0
    %v2016 = vadd.f32 %v2014, %v2015
    %v2017 = vsel %vm84, %v1981, 0.0
    %v2018 = vadd.f32 %v2016, %v2017
    %v2019 = vrot.slane %v2018, 4
    %v2020 = vadd.f32 %v2018, %v2019
    %v2021 = vrot.slane %v2020, 2
    %v2022 = vadd.f32 %v2020, %v2021
    %v2023 = vrot.slane %v2022, 1
    %v2024 = vadd.f32 %v2022, %v2023
    %v2025 = vsel %vm84, %v1982, 0.0
    %v2026 = vsel %vm84, %v1983, 0.0
    %v2027 = vadd.f32 %v2025, %v2026
    %v2028 = vsel %vm84, %v1984, 0.0
    %v2029 = vadd.f32 %v2027, %v2028
    %v2030 = vsel %vm84, %v1985, 0.0
    %v2031 = vadd.f32 %v2029, %v2030
    %v2032 = vrot.slane %v2031, 4
    %v2033 = vadd.f32 %v2031, %v2032
    %v2034 = vrot.slane %v2033, 2
    %v2035 = vadd.f32 %v2033, %v2034
    %v2036 = vrot.slane %v2035, 1
    %v2037 = vadd.f32 %v2035, %v2036
    %v2042 = vsel %vm290, %v2011, %v1998
    %v2043 = vsel %vm292, %v2024, %v2042
    %v2044 = vsel %vm294, %v2037, %v2043
    %v2046 = vsel %vm297, %v2044, 0.0
    %2047 = vadd.xlane.f32.xlu0 %v2046
    %v2048 = vpop.xlane.xlu0 %2047
    %v2049 = vld [vmem:[%s4 + $0x1c] sm:$0xf]
    %v2050 = vadd.f32 %v2048, %v2049
    %v2051 = vmax.f32 %v2050, 0.0
    %v2052 = vld [vmem:[%s5 + $0x1c] sm:$0xf]
    %2054 = vset.pattern.permute.xlu0 0
    %2055 = vperm.xlu0 %2054, %v2051
    %v2056 = vpop.permute.xlu0 %2055
    %v2058 = vmul.f32 %v2052, %v2056
    %v2059 = vsel %vm311, %v2058, 0.0
    %v2060 = vrot.slane %v2059, 4
    %v2061 = vadd.f32 %v2059, %v2060
    %v2062 = vrot.slane %v2061, 2
    %v2063 = vadd.f32 %v2061, %v2062
    %v2064 = vrot.slane %v2063, 1
    %v2065 = vadd.f32 %v2063, %v2064
    %v2066 = vadd.f32 %v1953, %v2065
    %2067 = vst.msk [vmem:[#allocation2 + $0x1] sm:$0x1] %vm1118, %v2066
    %v2069 = vlaneseq
    %v2070 = vshrl.u32 %v2069, 7
    %v2071 = vsub.s32 0, %v2070
    %v2072 = vrot.slane %v2066, %v2071
    %2073 = vrot.lane.b32.xlu0 %v2072, 120
    %v2074 = vpop.permute.xlu0 %2073
    %2076 = vst.msk [vmem:[#allocation4 + $0x1] sm:$0x1] %vm1118, %v2074
    // Predicated region
    $region30: #{vae_forward.1} parent=1 // pred_check
      _
    $region31: #{vae_forward.1} parent=1 // pred_check_branch
      %2078 = sbr.rel (0) target = $region33
    $region32: #{vae_forward.1} parent=1 // pred_region
      %s2080 = ssub.s32 32, 32
      %2081 = vsyncadd [#allocation3], %s2080
      %s2083 = sshll.u32 [#allocation2], 4
      %s2084 = int_to_ptr.vmem [resolvable:$true] %s2083
      %2086 = dma.vmem_to_hbm [thread:$0]  %s2084, 32, %s7, [#allocation3]
    $region33: #{vae_forward.1} parent=1 // pred_fallthru
      _
    // Predicated region
    $region34: #{vae_forward.1} parent=1 // pred_check
      _
    $region35: #{vae_forward.1} parent=1 // pred_check_branch
      %2088 = sbr.rel (0) target = $region37
    $region36: #{vae_forward.1} parent=1 // pred_region
      %s2090 = ssub.s32 32, 32
      %2091 = vsyncadd [#allocation5], %s2090
      %s2093 = sshll.u32 [#allocation4], 4
      %s2094 = int_to_ptr.vmem [resolvable:$true] %s2093
      %2096 = dma.vmem_to_hbm [thread:$0]  %s2094, 32, %s8, [#allocation5]
    $region37: #{vae_forward.1} parent=1 // pred_fallthru
      _
    // Predicated region
    $region38: #{vae_forward.1} parent=1 // pred_check
      _
    $region39: #{vae_forward.1} parent=1 // pred_check_branch
      %2098 = sbr.rel (0) target = $region41
    $region40: #{vae_forward.1} parent=1 // pred_region
      %2099 = dma.done [#allocation3], 32
    $region41: #{vae_forward.1} parent=1 // pred_fallthru
      _
    // Predicated region
    $region42: #{vae_forward.1} parent=1 // pred_check
      _
    $region43: #{vae_forward.1} parent=1 // pred_check_branch
      %2101 = sbr.rel (0) target = $region45
    $region44: #{vae_forward.1} parent=1 // pred_region
      %2102 = dma.done [#allocation5], 32
    $region45: #{vae_forward.1} parent=1 // pred_fallthru
      _
    %2103 = vsyncpa [#allocation3], 1
    %2104 = vsyncpa [#allocation5], 1

</llo_original>
